<compile_context>
chip_gen: v5e
topology: v5e:2x2
jax: 0.10.0
libtpu: 0.0.40
codegen_flags: <defaults>
</compile_context>

<pallas_src>
import functools

import jax
import jax.numpy as jnp
from jax import lax
from jax.experimental import pallas as pl
from jax.experimental.pallas import tpu as pltpu

# ----- model dimensions (vocab_size is text-derived in the original; fixed
#       deterministically here since this is a synthetic kernel) -------------
VOCAB = 58      # len(set(first_letter_text)) surrogate
EMB = 48        # embedding_dim
HID = 96        # LSTM hidden_size

HPAD = 128      # HID padded to a full lane group (per gate)
VPAD = 128      # VOCAB padded to a full lane group (lane-dense stores)


def _round_up(x, m):
    return (x + m - 1) // m * m


def _prep_gate_cols(w):
    """(K, 4*HID) in PyTorch (i,f,g,o) order -> (K, 4*HPAD) in (i,f,o,g)
    order, each gate's columns zero-padded HID -> HPAD.  The reorder makes
    the three sigmoid gates one contiguous 3*HPAD slab."""
    k = w.shape[0]
    w4 = w.reshape(k, 4, HID)
    w4 = w4[:, jnp.array([0, 1, 3, 2]), :]               # (i,f,g,o) -> (i,f,o,g)
    w4 = jnp.pad(w4, ((0, 0), (0, 0), (0, HPAD - HID)))
    return w4.reshape(k, 4 * HPAD)


def char_lstm_kernel(xw_ref, h0_ref, c0_ref, w_hh_ref, w_out_ref, b_out_ref,
                     out_ref, hn_ref, cn_ref, hs_scr, *, seq_len):
    """One time-chunk of the LSTM recurrence + output projection.

    xw_ref  : (T_CHUNK*Bp, 4*HPAD) bf16  pre-projected gate inputs (bias folded)
    out_ref : (T_CHUNK*Bp, VPAD)   f32   logits for this chunk
    hn_ref, cn_ref : (Bp, HPAD) f32      resident across the grid -> h/c carry
    hs_scr  : (T_CHUNK*Bp, HPAD)  bf16   hidden states of this chunk
    """
    bp = h0_ref.shape[0]                      # padded batch, static
    t_chunk = xw_ref.shape[0] // bp           # steps per chunk, static
    needs_mask = (seq_len % t_chunk) != 0     # static python bool
    chunk = pl.program_id(0)

    # Initialize the h/c carry from the initial state on the first chunk.
    @pl.when(chunk == 0)
    def _():
        hn_ref[...] = h0_ref[...]
        cn_ref[...] = c0_ref[...]

    base_t = chunk * t_chunk

    # Serial recurrence: per step one bf16 (Bp,128)@(128,512) MXU matmul +
    # gate elementwise math.  Gate boundaries are 128-lane aligned.
    def step(t, carry):
        h, c = carry
        off = pl.multiple_of(t * bp, bp)
        gates = (xw_ref[pl.ds(off, bp), :].astype(jnp.float32)
                 + jnp.dot(h.astype(jnp.bfloat16), w_hh_ref[...],
                           preferred_element_type=jnp.float32))
        sig = jax.nn.sigmoid(gates[:, :3 * HPAD])          # i, f, o together
        i_g = sig[:, 0 * HPAD:1 * HPAD]
        f_g = sig[:, 1 * HPAD:2 * HPAD]
        o_g = sig[:, 2 * HPAD:3 * HPAD]
        g_g = jnp.tanh(gates[:, 3 * HPAD:4 * HPAD])
        c_new = f_g * c + i_g * g_g
        h_new = o_g * jnp.tanh(c_new)
        hs_scr[pl.ds(off, bp), :] = h_new.astype(jnp.bfloat16)
        if needs_mask:
            # Last chunk may contain zero-padded timesteps: freeze the carry
            # there so h_n / c_n stay correct (padded logits rows are
            # stripped in the wrapper anyway).
            valid = (base_t + t) < seq_len
            h_new = jnp.where(valid, h_new, h)
            c_new = jnp.where(valid, c_new, c)
        return (h_new, c_new)

    h_fin, c_fin = lax.fori_loop(
        0, t_chunk, step, (hn_ref[...], cn_ref[...]),
        unroll=True if t_chunk <= 32 else 8)

    hn_ref[...] = h_fin
    cn_ref[...] = c_fin

    # Output projection for the whole chunk as one lane-dense bf16 matmul.
    out_ref[...] = (jnp.dot(hs_scr[...], w_out_ref[...],
                            preferred_element_type=jnp.float32)
                    + b_out_ref[...])


def character_lstm_forward(x_tokens, states, params, *, t_chunk=None):
    """Equivalent of CharacterLSTM.forward(x, states)."""
    h0, c0 = states                               # each (1, B, HID)
    B, T = x_tokens.shape
    Bp = max(8, _round_up(B, 8))                  # pad batch to sublanes
    if t_chunk is None:
        t_chunk = max(1, min(T, 2048 // Bp))      # ~2K rows per chunk
    T_pad = _round_up(T, t_chunk)
    n_chunks = T_pad // t_chunk
    rows = t_chunk * Bp

    # Fold embedding @ W_ih^T + (b_ih + b_hh) into one per-token table and
    # gather it (XLA glue): removes the K=48 matmul from the kernel.
    proj = (params["embedding"] @ params["w_ih"].T
            + (params["b_ih"] + params["b_hh"]))            # (V, 4*HID) f32
    proj_p = _prep_gate_cols(proj)                          # (V, 4*HPAD) f32

    xw = jnp.take(proj_p, x_tokens, axis=0)                 # (B, T, 512)
    xw = jnp.transpose(xw, (1, 0, 2))                       # (T, B, 512)
    xw = jnp.pad(xw, ((0, T_pad - T), (0, Bp - B), (0, 0))) # (T_pad, Bp, 512)
    xw_flat = xw.reshape(T_pad * Bp, 4 * HPAD).astype(jnp.bfloat16)

    w_hh_p = jnp.pad(_prep_gate_cols(params["w_hh"].T),
                     ((0, HPAD - HID), (0, 0))).astype(jnp.bfloat16)   # (128,512)
    w_out_p = jnp.pad(params["w_out"].T,
                      ((0, HPAD - HID), (0, VPAD - VOCAB))
                      ).astype(jnp.bfloat16)                           # (128,128)
    b_out_p = jnp.pad(params["b_out"], (0, VPAD - VOCAB)).reshape(1, VPAD)

    h0_p = jnp.pad(h0[0], ((0, Bp - B), (0, HPAD - HID)))   # (Bp, 128), pads zero
    c0_p = jnp.pad(c0[0], ((0, Bp - B), (0, HPAD - HID)))   # (Bp, 128), pads zero

    # VMEM budget (per-chunk blocks double-buffered by the pipeline).
    vmem_bytes = (2 * rows * 4 * HPAD * 2        # xw blocks (bf16)
                  + 2 * rows * VPAD * 4          # out blocks (f32)
                  + rows * HPAD * 2              # hs scratch (bf16)
                  + HPAD * 4 * HPAD * 2          # w_hh (bf16)
                  + HPAD * VPAD * 2 + VPAD * 4   # w_out (bf16), b_out (f32)
                  + 4 * Bp * HPAD * 4)           # h0/c0/hn/cn (f32)
    vmem_limit = int(min(2 * vmem_bytes + (8 << 20), 64 << 20))

    grid_spec = pltpu.PrefetchScalarGridSpec(
        num_scalar_prefetch=0,
        grid=(n_chunks,),
        in_specs=[
            pl.BlockSpec((rows, 4 * HPAD), lambda t: (t, 0)),   # xw chunk
            pl.BlockSpec((Bp, HPAD), lambda t: (0, 0)),         # h0
            pl.BlockSpec((Bp, HPAD), lambda t: (0, 0)),         # c0
            pl.BlockSpec((HPAD, 4 * HPAD), lambda t: (0, 0)),   # w_hh
            pl.BlockSpec((HPAD, VPAD), lambda t: (0, 0)),       # w_out
            pl.BlockSpec((1, VPAD), lambda t: (0, 0)),          # b_out
        ],
        out_specs=(
            pl.BlockSpec((rows, VPAD), lambda t: (t, 0)),       # logits chunk
            pl.BlockSpec((Bp, HPAD), lambda t: (0, 0)),         # h_n (carry)
            pl.BlockSpec((Bp, HPAD), lambda t: (0, 0)),         # c_n (carry)
        ),
        scratch_shapes=[pltpu.VMEM((rows, HPAD), jnp.bfloat16)],
    )

    out_flat, hn, cn = pl.pallas_call(
        functools.partial(char_lstm_kernel, seq_len=T),
        out_shape=(
            jax.ShapeDtypeStruct((T_pad * Bp, VPAD), jnp.float32),
            jax.ShapeDtypeStruct((Bp, HPAD), jnp.float32),
            jax.ShapeDtypeStruct((Bp, HPAD), jnp.float32),
        ),
        grid_spec=grid_spec,
        compiler_params=pltpu.CompilerParams(
            dimension_semantics=("arbitrary",),
            vmem_limit_bytes=vmem_limit),
    )(xw_flat, h0_p, c0_p, w_hh_p, w_out_p, b_out_p)

    # Strip padding, back to batch_first, flatten like out.reshape(-1, V).
    out = out_flat.reshape(T_pad, Bp, VPAD)[:T, :B, :VOCAB]
    out = jnp.transpose(out, (1, 0, 2)).reshape(B * T, VOCAB)
    return out, (hn[:B, :HID][None], cn[:B, :HID][None])


def init_params(key):
    """Deterministic parameter init mimicking PyTorch defaults."""
    ks = jax.random.split(key, 7)
    bound = 1.0 / jnp.sqrt(HID)
    u = lambda k, shape: jax.random.uniform(k, shape, jnp.float32, -bound, bound)
    return {
        "embedding": jax.random.normal(ks[0], (VOCAB, EMB), jnp.float32),
        "w_ih": u(ks[1], (4 * HID, EMB)),
        "w_hh": u(ks[2], (4 * HID, HID)),
        "b_ih": u(ks[3], (4 * HID,)),
        "b_hh": u(ks[4], (4 * HID,)),
        "w_out": u(ks[5], (VOCAB, HID)),
        "b_out": u(ks[6], (VOCAB,)),
    }


def init_state(batch_size):
    return (jnp.zeros((1, batch_size, HID), jnp.float32),
            jnp.zeros((1, batch_size, HID), jnp.float32))


def reference_forward(x_tokens, states, params):
    """Pure-JAX f32 reference with identical semantics (for validation)."""
    h, c = states[0][0], states[1][0]
    x_emb = jnp.take(params["embedding"], x_tokens, axis=0)
    w_ih, w_hh = params["w_ih"], params["w_hh"]
    b = params["b_ih"] + params["b_hh"]

    def step(carry, x_t):
        h, c = carry
        gates = x_t @ w_ih.T + h @ w_hh.T + b
        i, f, g, o = jnp.split(gates, 4, axis=-1)
        c = jax.nn.sigmoid(f) * c + jax.nn.sigmoid(i) * jnp.tanh(g)
        h = jax.nn.sigmoid(o) * jnp.tanh(c)
        return (h, c), h

    (h, c), hs = jax.lax.scan(step, (h, c), jnp.transpose(x_emb, (1, 0, 2)))
    hs = jnp.transpose(hs, (1, 0, 2))                 # (B, T, H)
    out = hs @ params["w_out"].T + params["b_out"]    # (B, T, V)
    return out.reshape(-1, VOCAB), (h[None], c[None])


if __name__ == "__main__":
    key = jax.random.PRNGKey(0)
    k_par, k_tok = jax.random.split(key)

    B, T = 4, 8
    params = init_params(k_par)
    x_tokens = jax.random.randint(k_tok, (B, T), 0, VOCAB, dtype=jnp.int32)
    states = init_state(B)

    out, (h_n, c_n) = character_lstm_forward(x_tokens, states, params)
    jax.block_until_ready((out, h_n, c_n))

    ref_out, (ref_h, ref_c) = reference_forward(x_tokens, states, params)
    assert out.shape == (B * T, VOCAB)
    assert h_n.shape == (1, B, HID) and c_n.shape == (1, B, HID)
    # bf16 MXU operands in the recurrence / projections -> looser tolerance
    # than the pure-f32 version.
    assert jnp.allclose(out, ref_out, rtol=2e-2, atol=2e-2)
    assert jnp.allclose(h_n, ref_h, rtol=2e-2, atol=2e-2)
    assert jnp.allclose(c_n, ref_c, rtol=2e-2, atol=2e-2)

    print("KERNEL_OK")
</pallas_src>

<mosaic_0001>
module attributes {stable_mosaic.version = 11 : i64} {
  func.func @char_lstm_kernel(%arg0: i32, %arg1: memref<64x512xbf16, #tpu.memory_space<vmem>>, %arg2: memref<8x128xf32, #tpu.memory_space<vmem>>, %arg3: memref<8x128xf32, #tpu.memory_space<vmem>>, %arg4: memref<128x512xbf16, #tpu.memory_space<vmem>>, %arg5: memref<128x128xbf16, #tpu.memory_space<vmem>>, %arg6: memref<1x128xf32, #tpu.memory_space<vmem>>, %arg7: memref<64x128xf32, #tpu.memory_space<vmem>>, %arg8: memref<8x128xf32, #tpu.memory_space<vmem>>, %arg9: memref<8x128xf32, #tpu.memory_space<vmem>>, %arg10: memref<64x128xbf16, #tpu.memory_space<vmem>>) attributes {dimension_semantics = [#tpu.dimension_semantics<arbitrary>], iteration_bounds = array<i64: 1>, scalar_prefetch = 0 : i64, scratch_operands = 1 : i64, tpu.core_type = #tpu.core_type<tc>, window_params = [{transform_indices = @transform_0, window_bounds = array<i64: 64, 512>}, {pipeline_mode = #tpu.pipeline_mode<synchronous>, transform_indices = @transform_1, window_bounds = array<i64: 8, 128>}, {pipeline_mode = #tpu.pipeline_mode<synchronous>, transform_indices = @transform_2, window_bounds = array<i64: 8, 128>}, {pipeline_mode = #tpu.pipeline_mode<synchronous>, transform_indices = @transform_3, window_bounds = array<i64: 128, 512>}, {pipeline_mode = #tpu.pipeline_mode<synchronous>, transform_indices = @transform_4, window_bounds = array<i64: 128, 128>}, {pipeline_mode = #tpu.pipeline_mode<synchronous>, transform_indices = @transform_5, window_bounds = array<i64: 1, 128>}, {transform_indices = @transform_6, window_bounds = array<i64: 64, 128>}, {pipeline_mode = #tpu.pipeline_mode<synchronous>, transform_indices = @transform_7, window_bounds = array<i64: 8, 128>}, {pipeline_mode = #tpu.pipeline_mode<synchronous>, transform_indices = @transform_8, window_bounds = array<i64: 8, 128>}]} {
    %c0_i32 = arith.constant 0 : i32
    %0 = arith.cmpi eq, %arg0, %c0_i32 : i32
    %1 = arith.extui %0 : i1 to i32
    %c0_i32_0 = arith.constant 0 : i32
    %2 = arith.cmpi ne, %1, %c0_i32_0 : i32
    scf.if %2 {
      %c0_73 = arith.constant 0 : index
      %c0_74 = arith.constant 0 : index
      %238 = vector.load %arg2[%c0_73, %c0_74] : memref<8x128xf32, #tpu.memory_space<vmem>>, vector<8x128xf32>
      %c0_75 = arith.constant 0 : index
      %c0_76 = arith.constant 0 : index
      %239 = vector.load %arg8[%c0_75, %c0_76] : memref<8x128xf32, #tpu.memory_space<vmem>>, vector<8x128xf32>
      tpu.vector_store %arg8[%c0_75, %c0_76], %238 {strides = array<i32>} : memref<8x128xf32, #tpu.memory_space<vmem>>, vector<8x128xf32>,
      %c0_77 = arith.constant 0 : index
      %c0_78 = arith.constant 0 : index
      %240 = vector.load %arg3[%c0_77, %c0_78] : memref<8x128xf32, #tpu.memory_space<vmem>>, vector<8x128xf32>
      %c0_79 = arith.constant 0 : index
      %c0_80 = arith.constant 0 : index
      %241 = vector.load %arg9[%c0_79, %c0_80] : memref<8x128xf32, #tpu.memory_space<vmem>>, vector<8x128xf32>
      tpu.vector_store %arg9[%c0_79, %c0_80], %240 {strides = array<i32>} : memref<8x128xf32, #tpu.memory_space<vmem>>, vector<8x128xf32>,
    } else {
    }
    %c0 = arith.constant 0 : index
    %c0_1 = arith.constant 0 : index
    %3 = vector.load %arg8[%c0, %c0_1] : memref<8x128xf32, #tpu.memory_space<vmem>>, vector<8x128xf32>
    %c0_2 = arith.constant 0 : index
    %c0_3 = arith.constant 0 : index
    %4 = vector.load %arg9[%c0_2, %c0_3] : memref<8x128xf32, #tpu.memory_space<vmem>>, vector<8x128xf32>
    %c0_i32_4 = arith.constant 0 : i32
    %c8_i32 = arith.constant 8 : i32
    %5 = arith.muli %c0_i32_4, %c8_i32 : i32
    %6 = tpu.assume_multiple %5, 8 : i32
    %7 = arith.index_cast %6 : i32 to index
    %c0_5 = arith.constant 0 : index
    %8 = vector.load %arg1[%7, %c0_5] : memref<64x512xbf16, #tpu.memory_space<vmem>>, vector<8x512xbf16>
    %9 = arith.extf %8 : vector<8x512xbf16> to vector<8x512xf32>
    %10 = arith.truncf %3 : vector<8x128xf32> to vector<8x128xbf16>
    %c0_6 = arith.constant 0 : index
    %c0_7 = arith.constant 0 : index
    %11 = vector.load %arg4[%c0_6, %c0_7] : memref<128x512xbf16, #tpu.memory_space<vmem>>, vector<128x512xbf16>
    %cst = arith.constant dense<0.000000e+00> : vector<8x512xf32>
    %12 = tpu.matmul %10, %11, %cst {dimension_numbers = #tpu.dot_dimension_numbers<[1], [0], [0], [1], [0, 0, 1, 1], [], []>} : vector<8x128xbf16>, vector<128x512xbf16>, vector<8x512xf32> -> vector<8x512xf32>
    %13 = arith.addf %9, %12 : vector<8x512xf32>
    %14 = vector.extract_strided_slice %13 {offsets = [0, 0], sizes = [8, 384], strides = [1, 1]} : vector<8x512xf32> to vector<8x384xf32>
    %15 = arith.negf %14 : vector<8x384xf32>
    %16 = math.exp %15 : vector<8x384xf32>
    %cst_8 = arith.constant 1.000000e+00 : f32
    %17 = vector.broadcast %cst_8 : f32 to vector<8x384xf32>
    %18 = arith.addf %17, %16 : vector<8x384xf32>
    %19 = arith.divf %17, %18 : vector<8x384xf32>
    %20 = vector.extract_strided_slice %19 {offsets = [0, 0], sizes = [8, 128], strides = [1, 1]} : vector<8x384xf32> to vector<8x128xf32>
    %21 = vector.extract_strided_slice %19 {offsets = [0, 128], sizes = [8, 128], strides = [1, 1]} : vector<8x384xf32> to vector<8x128xf32>
    %22 = vector.extract_strided_slice %19 {offsets = [0, 256], sizes = [8, 128], strides = [1, 1]} : vector<8x384xf32> to vector<8x128xf32>
    %23 = vector.extract_strided_slice %13 {offsets = [0, 384], sizes = [8, 128], strides = [1, 1]} : vector<8x512xf32> to vector<8x128xf32>
    %24 = math.tanh %23 : vector<8x128xf32>
    %25 = arith.mulf %21, %4 : vector<8x128xf32>
    %26 = arith.mulf %20, %24 : vector<8x128xf32>
    %27 = arith.addf %25, %26 : vector<8x128xf32>
    %28 = math.tanh %27 : vector<8x128xf32>
    %29 = arith.mulf %22, %28 : vector<8x128xf32>
    %30 = arith.truncf %29 : vector<8x128xf32> to vector<8x128xbf16>
    %31 = arith.index_cast %6 : i32 to index
    %c0_9 = arith.constant 0 : index
    %32 = vector.load %arg10[%31, %c0_9] : memref<64x128xbf16, #tpu.memory_space<vmem>>, vector<8x128xbf16>
    tpu.vector_store %arg10[%31, %c0_9], %30 {strides = array<i32>} : memref<64x128xbf16, #tpu.memory_space<vmem>>, vector<8x128xbf16>,
    %c1_i32 = arith.constant 1 : i32
    %c8_i32_10 = arith.constant 8 : i32
    %33 = arith.muli %c1_i32, %c8_i32_10 : i32
    %34 = tpu.assume_multiple %33, 8 : i32
    %35 = arith.index_cast %34 : i32 to index
    %c0_11 = arith.constant 0 : index
    %36 = vector.load %arg1[%35, %c0_11] : memref<64x512xbf16, #tpu.memory_space<vmem>>, vector<8x512xbf16>
    %37 = arith.extf %36 : vector<8x512xbf16> to vector<8x512xf32>
    %38 = arith.truncf %29 : vector<8x128xf32> to vector<8x128xbf16>
    %c0_12 = arith.constant 0 : index
    %c0_13 = arith.constant 0 : index
    %39 = vector.load %arg4[%c0_12, %c0_13] : memref<128x512xbf16, #tpu.memory_space<vmem>>, vector<128x512xbf16>
    %cst_14 = arith.constant dense<0.000000e+00> : vector<8x512xf32>
    %40 = tpu.matmul %38, %39, %cst_14 {dimension_numbers = #tpu.dot_dimension_numbers<[1], [0], [0], [1], [0, 0, 1, 1], [], []>} : vector<8x128xbf16>, vector<128x512xbf16>, vector<8x512xf32> -> vector<8x512xf32>
    %41 = arith.addf %37, %40 : vector<8x512xf32>
    %42 = vector.extract_strided_slice %41 {offsets = [0, 0], sizes = [8, 384], strides = [1, 1]} : vector<8x512xf32> to vector<8x384xf32>
    %43 = arith.negf %42 : vector<8x384xf32>
    %44 = math.exp %43 : vector<8x384xf32>
    %cst_15 = arith.constant 1.000000e+00 : f32
    %45 = vector.broadcast %cst_15 : f32 to vector<8x384xf32>
    %46 = arith.addf %45, %44 : vector<8x384xf32>
    %47 = arith.divf %45, %46 : vector<8x384xf32>
    %48 = vector.extract_strided_slice %47 {offsets = [0, 0], sizes = [8, 128], strides = [1, 1]} : vector<8x384xf32> to vector<8x128xf32>
    %49 = vector.extract_strided_slice %47 {offsets = [0, 128], sizes = [8, 128], strides = [1, 1]} : vector<8x384xf32> to vector<8x128xf32>
    %50 = vector.extract_strided_slice %47 {offsets = [0, 256], sizes = [8, 128], strides = [1, 1]} : vector<8x384xf32> to vector<8x128xf32>
    %51 = vector.extract_strided_slice %41 {offsets = [0, 384], sizes = [8, 128], strides = [1, 1]} : vector<8x512xf32> to vector<8x128xf32>
    %52 = math.tanh %51 : vector<8x128xf32>
    %53 = arith.mulf %49, %27 : vector<8x128xf32>
    %54 = arith.mulf %48, %52 : vector<8x128xf32>
    %55 = arith.addf %53, %54 : vector<8x128xf32>
    %56 = math.tanh %55 : vector<8x128xf32>
    %57 = arith.mulf %50, %56 : vector<8x128xf32>
    %58 = arith.truncf %57 : vector<8x128xf32> to vector<8x128xbf16>
    %59 = arith.index_cast %34 : i32 to index
    %c0_16 = arith.constant 0 : index
    %60 = vector.load %arg10[%59, %c0_16] : memref<64x128xbf16, #tpu.memory_space<vmem>>, vector<8x128xbf16>
    tpu.vector_store %arg10[%59, %c0_16], %58 {strides = array<i32>} : memref<64x128xbf16, #tpu.memory_space<vmem>>, vector<8x128xbf16>,
    %c2_i32 = arith.constant 2 : i32
    %c8_i32_17 = arith.constant 8 : i32
    %61 = arith.muli %c2_i32, %c8_i32_17 : i32
    %62 = tpu.assume_multiple %61, 8 : i32
    %63 = arith.index_cast %62 : i32 to index
    %c0_18 = arith.constant 0 : index
    %64 = vector.load %arg1[%63, %c0_18] : memref<64x512xbf16, #tpu.memory_space<vmem>>, vector<8x512xbf16>
    %65 = arith.extf %64 : vector<8x512xbf16> to vector<8x512xf32>
    %66 = arith.truncf %57 : vector<8x128xf32> to vector<8x128xbf16>
    %c0_19 = arith.constant 0 : index
    %c0_20 = arith.constant 0 : index
    %67 = vector.load %arg4[%c0_19, %c0_20] : memref<128x512xbf16, #tpu.memory_space<vmem>>, vector<128x512xbf16>
    %cst_21 = arith.constant dense<0.000000e+00> : vector<8x512xf32>
    %68 = tpu.matmul %66, %67, %cst_21 {dimension_numbers = #tpu.dot_dimension_numbers<[1], [0], [0], [1], [0, 0, 1, 1], [], []>} : vector<8x128xbf16>, vector<128x512xbf16>, vector<8x512xf32> -> vector<8x512xf32>
    %69 = arith.addf %65, %68 : vector<8x512xf32>
    %70 = vector.extract_strided_slice %69 {offsets = [0, 0], sizes = [8, 384], strides = [1, 1]} : vector<8x512xf32> to vector<8x384xf32>
    %71 = arith.negf %70 : vector<8x384xf32>
    %72 = math.exp %71 : vector<8x384xf32>
    %cst_22 = arith.constant 1.000000e+00 : f32
    %73 = vector.broadcast %cst_22 : f32 to vector<8x384xf32>
    %74 = arith.addf %73, %72 : vector<8x384xf32>
    %75 = arith.divf %73, %74 : vector<8x384xf32>
    %76 = vector.extract_strided_slice %75 {offsets = [0, 0], sizes = [8, 128], strides = [1, 1]} : vector<8x384xf32> to vector<8x128xf32>
    %77 = vector.extract_strided_slice %75 {offsets = [0, 128], sizes = [8, 128], strides = [1, 1]} : vector<8x384xf32> to vector<8x128xf32>
    %78 = vector.extract_strided_slice %75 {offsets = [0, 256], sizes = [8, 128], strides = [1, 1]} : vector<8x384xf32> to vector<8x128xf32>
    %79 = vector.extract_strided_slice %69 {offsets = [0, 384], sizes = [8, 128], strides = [1, 1]} : vector<8x512xf32> to vector<8x128xf32>
    %80 = math.tanh %79 : vector<8x128xf32>
    %81 = arith.mulf %77, %55 : vector<8x128xf32>
    %82 = arith.mulf %76, %80 : vector<8x128xf32>
    %83 = arith.addf %81, %82 : vector<8x128xf32>
    %84 = math.tanh %83 : vector<8x128xf32>
    %85 = arith.mulf %78, %84 : vector<8x128xf32>
    %86 = arith.truncf %85 : vector<8x128xf32> to vector<8x128xbf16>
    %87 = arith.index_cast %62 : i32 to index
    %c0_23 = arith.constant 0 : index
    %88 = vector.load %arg10[%87, %c0_23] : memref<64x128xbf16, #tpu.memory_space<vmem>>, vector<8x128xbf16>
    tpu.vector_store %arg10[%87, %c0_23], %86 {strides = array<i32>} : memref<64x128xbf16, #tpu.memory_space<vmem>>, vector<8x128xbf16>,
    %c3_i32 = arith.constant 3 : i32
    %c8_i32_24 = arith.constant 8 : i32
    %89 = arith.muli %c3_i32, %c8_i32_24 : i32
    %90 = tpu.assume_multiple %89, 8 : i32
    %91 = arith.index_cast %90 : i32 to index
    %c0_25 = arith.constant 0 : index
    %92 = vector.load %arg1[%91, %c0_25] : memref<64x512xbf16, #tpu.memory_space<vmem>>, vector<8x512xbf16>
    %93 = arith.extf %92 : vector<8x512xbf16> to vector<8x512xf32>
    %94 = arith.truncf %85 : vector<8x128xf32> to vector<8x128xbf16>
    %c0_26 = arith.constant 0 : index
    %c0_27 = arith.constant 0 : index
    %95 = vector.load %arg4[%c0_26, %c0_27] : memref<128x512xbf16, #tpu.memory_space<vmem>>, vector<128x512xbf16>
    %cst_28 = arith.constant dense<0.000000e+00> : vector<8x512xf32>
    %96 = tpu.matmul %94, %95, %cst_28 {dimension_numbers = #tpu.dot_dimension_numbers<[1], [0], [0], [1], [0, 0, 1, 1], [], []>} : vector<8x128xbf16>, vector<128x512xbf16>, vector<8x512xf32> -> vector<8x512xf32>
    %97 = arith.addf %93, %96 : vector<8x512xf32>
    %98 = vector.extract_strided_slice %97 {offsets = [0, 0], sizes = [8, 384], strides = [1, 1]} : vector<8x512xf32> to vector<8x384xf32>
    %99 = arith.negf %98 : vector<8x384xf32>
    %100 = math.exp %99 : vector<8x384xf32>
    %cst_29 = arith.constant 1.000000e+00 : f32
    %101 = vector.broadcast %cst_29 : f32 to vector<8x384xf32>
    %102 = arith.addf %101, %100 : vector<8x384xf32>
    %103 = arith.divf %101, %102 : vector<8x384xf32>
    %104 = vector.extract_strided_slice %103 {offsets = [0, 0], sizes = [8, 128], strides = [1, 1]} : vector<8x384xf32> to vector<8x128xf32>
    %105 = vector.extract_strided_slice %103 {offsets = [0, 128], sizes = [8, 128], strides = [1, 1]} : vector<8x384xf32> to vector<8x128xf32>
    %106 = vector.extract_strided_slice %103 {offsets = [0, 256], sizes = [8, 128], strides = [1, 1]} : vector<8x384xf32> to vector<8x128xf32>
    %107 = vector.extract_strided_slice %97 {offsets = [0, 384], sizes = [8, 128], strides = [1, 1]} : vector<8x512xf32> to vector<8x128xf32>
    %108 = math.tanh %107 : vector<8x128xf32>
    %109 = arith.mulf %105, %83 : vector<8x128xf32>
    %110 = arith.mulf %104, %108 : vector<8x128xf32>
    %111 = arith.addf %109, %110 : vector<8x128xf32>
    %112 = math.tanh %111 : vector<8x128xf32>
    %113 = arith.mulf %106, %112 : vector<8x128xf32>
    %114 = arith.truncf %113 : vector<8x128xf32> to vector<8x128xbf16>
    %115 = arith.index_cast %90 : i32 to index
    %c0_30 = arith.constant 0 : index
    %116 = vector.load %arg10[%115, %c0_30] : memref<64x128xbf16, #tpu.memory_space<vmem>>, vector<8x128xbf16>
    tpu.vector_store %arg10[%115, %c0_30], %114 {strides = array<i32>} : memref<64x128xbf16, #tpu.memory_space<vmem>>, vector<8x128xbf16>,
    %c4_i32 = arith.constant 4 : i32
    %c8_i32_31 = arith.constant 8 : i32
    %117 = arith.muli %c4_i32, %c8_i32_31 : i32
    %118 = tpu.assume_multiple %117, 8 : i32
    %119 = arith.index_cast %118 : i32 to index
    %c0_32 = arith.constant 0 : index
    %120 = vector.load %arg1[%119, %c0_32] : memref<64x512xbf16, #tpu.memory_space<vmem>>, vector<8x512xbf16>
    %121 = arith.extf %120 : vector<8x512xbf16> to vector<8x512xf32>
    %122 = arith.truncf %113 : vector<8x128xf32> to vector<8x128xbf16>
    %c0_33 = arith.constant 0 : index
    %c0_34 = arith.constant 0 : index
    %123 = vector.load %arg4[%c0_33, %c0_34] : memref<128x512xbf16, #tpu.memory_space<vmem>>, vector<128x512xbf16>
    %cst_35 = arith.constant dense<0.000000e+00> : vector<8x512xf32>
    %124 = tpu.matmul %122, %123, %cst_35 {dimension_numbers = #tpu.dot_dimension_numbers<[1], [0], [0], [1], [0, 0, 1, 1], [], []>} : vector<8x128xbf16>, vector<128x512xbf16>, vector<8x512xf32> -> vector<8x512xf32>
    %125 = arith.addf %121, %124 : vector<8x512xf32>
    %126 = vector.extract_strided_slice %125 {offsets = [0, 0], sizes = [8, 384], strides = [1, 1]} : vector<8x512xf32> to vector<8x384xf32>
    %127 = arith.negf %126 : vector<8x384xf32>
    %128 = math.exp %127 : vector<8x384xf32>
    %cst_36 = arith.constant 1.000000e+00 : f32
    %129 = vector.broadcast %cst_36 : f32 to vector<8x384xf32>
    %130 = arith.addf %129, %128 : vector<8x384xf32>
    %131 = arith.divf %129, %130 : vector<8x384xf32>
    %132 = vector.extract_strided_slice %131 {offsets = [0, 0], sizes = [8, 128], strides = [1, 1]} : vector<8x384xf32> to vector<8x128xf32>
    %133 = vector.extract_strided_slice %131 {offsets = [0, 128], sizes = [8, 128], strides = [1, 1]} : vector<8x384xf32> to vector<8x128xf32>
    %134 = vector.extract_strided_slice %131 {offsets = [0, 256], sizes = [8, 128], strides = [1, 1]} : vector<8x384xf32> to vector<8x128xf32>
    %135 = vector.extract_strided_slice %125 {offsets = [0, 384], sizes = [8, 128], strides = [1, 1]} : vector<8x512xf32> to vector<8x128xf32>
    %136 = math.tanh %135 : vector<8x128xf32>
    %137 = arith.mulf %133, %111 : vector<8x128xf32>
    %138 = arith.mulf %132, %136 : vector<8x128xf32>
    %139 = arith.addf %137, %138 : vector<8x128xf32>
    %140 = math.tanh %139 : vector<8x128xf32>
    %141 = arith.mulf %134, %140 : vector<8x128xf32>
    %142 = arith.truncf %141 : vector<8x128xf32> to vector<8x128xbf16>
    %143 = arith.index_cast %118 : i32 to index
    %c0_37 = arith.constant 0 : index
    %144 = vector.load %arg10[%143, %c0_37] : memref<64x128xbf16, #tpu.memory_space<vmem>>, vector<8x128xbf16>
    tpu.vector_store %arg10[%143, %c0_37], %142 {strides = array<i32>} : memref<64x128xbf16, #tpu.memory_space<vmem>>, vector<8x128xbf16>,
    %c5_i32 = arith.constant 5 : i32
    %c8_i32_38 = arith.constant 8 : i32
    %145 = arith.muli %c5_i32, %c8_i32_38 : i32
    %146 = tpu.assume_multiple %145, 8 : i32
    %147 = arith.index_cast %146 : i32 to index
    %c0_39 = arith.constant 0 : index
    %148 = vector.load %arg1[%147, %c0_39] : memref<64x512xbf16, #tpu.memory_space<vmem>>, vector<8x512xbf16>
    %149 = arith.extf %148 : vector<8x512xbf16> to vector<8x512xf32>
    %150 = arith.truncf %141 : vector<8x128xf32> to vector<8x128xbf16>
    %c0_40 = arith.constant 0 : index
    %c0_41 = arith.constant 0 : index
    %151 = vector.load %arg4[%c0_40, %c0_41] : memref<128x512xbf16, #tpu.memory_space<vmem>>, vector<128x512xbf16>
    %cst_42 = arith.constant dense<0.000000e+00> : vector<8x512xf32>
    %152 = tpu.matmul %150, %151, %cst_42 {dimension_numbers = #tpu.dot_dimension_numbers<[1], [0], [0], [1], [0, 0, 1, 1], [], []>} : vector<8x128xbf16>, vector<128x512xbf16>, vector<8x512xf32> -> vector<8x512xf32>
    %153 = arith.addf %149, %152 : vector<8x512xf32>
    %154 = vector.extract_strided_slice %153 {offsets = [0, 0], sizes = [8, 384], strides = [1, 1]} : vector<8x512xf32> to vector<8x384xf32>
    %155 = arith.negf %154 : vector<8x384xf32>
    %156 = math.exp %155 : vector<8x384xf32>
    %cst_43 = arith.constant 1.000000e+00 : f32
    %157 = vector.broadcast %cst_43 : f32 to vector<8x384xf32>
    %158 = arith.addf %157, %156 : vector<8x384xf32>
    %159 = arith.divf %157, %158 : vector<8x384xf32>
    %160 = vector.extract_strided_slice %159 {offsets = [0, 0], sizes = [8, 128], strides = [1, 1]} : vector<8x384xf32> to vector<8x128xf32>
    %161 = vector.extract_strided_slice %159 {offsets = [0, 128], sizes = [8, 128], strides = [1, 1]} : vector<8x384xf32> to vector<8x128xf32>
    %162 = vector.extract_strided_slice %159 {offsets = [0, 256], sizes = [8, 128], strides = [1, 1]} : vector<8x384xf32> to vector<8x128xf32>
    %163 = vector.extract_strided_slice %153 {offsets = [0, 384], sizes = [8, 128], strides = [1, 1]} : vector<8x512xf32> to vector<8x128xf32>
    %164 = math.tanh %163 : vector<8x128xf32>
    %165 = arith.mulf %161, %139 : vector<8x128xf32>
    %166 = arith.mulf %160, %164 : vector<8x128xf32>
    %167 = arith.addf %165, %166 : vector<8x128xf32>
    %168 = math.tanh %167 : vector<8x128xf32>
    %169 = arith.mulf %162, %168 : vector<8x128xf32>
    %170 = arith.truncf %169 : vector<8x128xf32> to vector<8x128xbf16>
    %171 = arith.index_cast %146 : i32 to index
    %c0_44 = arith.constant 0 : index
    %172 = vector.load %arg10[%171, %c0_44] : memref<64x128xbf16, #tpu.memory_space<vmem>>, vector<8x128xbf16>
    tpu.vector_store %arg10[%171, %c0_44], %170 {strides = array<i32>} : memref<64x128xbf16, #tpu.memory_space<vmem>>, vector<8x128xbf16>,
    %c6_i32 = arith.constant 6 : i32
    %c8_i32_45 = arith.constant 8 : i32
    %173 = arith.muli %c6_i32, %c8_i32_45 : i32
    %174 = tpu.assume_multiple %173, 8 : i32
    %175 = arith.index_cast %174 : i32 to index
    %c0_46 = arith.constant 0 : index
    %176 = vector.load %arg1[%175, %c0_46] : memref<64x512xbf16, #tpu.memory_space<vmem>>, vector<8x512xbf16>
    %177 = arith.extf %176 : vector<8x512xbf16> to vector<8x512xf32>
    %178 = arith.truncf %169 : vector<8x128xf32> to vector<8x128xbf16>
    %c0_47 = arith.constant 0 : index
    %c0_48 = arith.constant 0 : index
    %179 = vector.load %arg4[%c0_47, %c0_48] : memref<128x512xbf16, #tpu.memory_space<vmem>>, vector<128x512xbf16>
    %cst_49 = arith.constant dense<0.000000e+00> : vector<8x512xf32>
    %180 = tpu.matmul %178, %179, %cst_49 {dimension_numbers = #tpu.dot_dimension_numbers<[1], [0], [0], [1], [0, 0, 1, 1], [], []>} : vector<8x128xbf16>, vector<128x512xbf16>, vector<8x512xf32> -> vector<8x512xf32>
    %181 = arith.addf %177, %180 : vector<8x512xf32>
    %182 = vector.extract_strided_slice %181 {offsets = [0, 0], sizes = [8, 384], strides = [1, 1]} : vector<8x512xf32> to vector<8x384xf32>
    %183 = arith.negf %182 : vector<8x384xf32>
    %184 = math.exp %183 : vector<8x384xf32>
    %cst_50 = arith.constant 1.000000e+00 : f32
    %185 = vector.broadcast %cst_50 : f32 to vector<8x384xf32>
    %186 = arith.addf %185, %184 : vector<8x384xf32>
    %187 = arith.divf %185, %186 : vector<8x384xf32>
    %188 = vector.extract_strided_slice %187 {offsets = [0, 0], sizes = [8, 128], strides = [1, 1]} : vector<8x384xf32> to vector<8x128xf32>
    %189 = vector.extract_strided_slice %187 {offsets = [0, 128], sizes = [8, 128], strides = [1, 1]} : vector<8x384xf32> to vector<8x128xf32>
    %190 = vector.extract_strided_slice %187 {offsets = [0, 256], sizes = [8, 128], strides = [1, 1]} : vector<8x384xf32> to vector<8x128xf32>
    %191 = vector.extract_strided_slice %181 {offsets = [0, 384], sizes = [8, 128], strides = [1, 1]} : vector<8x512xf32> to vector<8x128xf32>
    %192 = math.tanh %191 : vector<8x128xf32>
    %193 = arith.mulf %189, %167 : vector<8x128xf32>
    %194 = arith.mulf %188, %192 : vector<8x128xf32>
    %195 = arith.addf %193, %194 : vector<8x128xf32>
    %196 = math.tanh %195 : vector<8x128xf32>
    %197 = arith.mulf %190, %196 : vector<8x128xf32>
    %198 = arith.truncf %197 : vector<8x128xf32> to vector<8x128xbf16>
    %199 = arith.index_cast %174 : i32 to index
    %c0_51 = arith.constant 0 : index
    %200 = vector.load %arg10[%199, %c0_51] : memref<64x128xbf16, #tpu.memory_space<vmem>>, vector<8x128xbf16>
    tpu.vector_store %arg10[%199, %c0_51], %198 {strides = array<i32>} : memref<64x128xbf16, #tpu.memory_space<vmem>>, vector<8x128xbf16>,
    %c7_i32 = arith.constant 7 : i32
    %c8_i32_52 = arith.constant 8 : i32
    %201 = arith.muli %c7_i32, %c8_i32_52 : i32
    %202 = tpu.assume_multiple %201, 8 : i32
    %203 = arith.index_cast %202 : i32 to index
    %c0_53 = arith.constant 0 : index
    %204 = vector.load %arg1[%203, %c0_53] : memref<64x512xbf16, #tpu.memory_space<vmem>>, vector<8x512xbf16>
    %205 = arith.extf %204 : vector<8x512xbf16> to vector<8x512xf32>
    %206 = arith.truncf %197 : vector<8x128xf32> to vector<8x128xbf16>
    %c0_54 = arith.constant 0 : index
    %c0_55 = arith.constant 0 : index
    %207 = vector.load %arg4[%c0_54, %c0_55] : memref<128x512xbf16, #tpu.memory_space<vmem>>, vector<128x512xbf16>
    %cst_56 = arith.constant dense<0.000000e+00> : vector<8x512xf32>
    %208 = tpu.matmul %206, %207, %cst_56 {dimension_numbers = #tpu.dot_dimension_numbers<[1], [0], [0], [1], [0, 0, 1, 1], [], []>} : vector<8x128xbf16>, vector<128x512xbf16>, vector<8x512xf32> -> vector<8x512xf32>
    %209 = arith.addf %205, %208 : vector<8x512xf32>
    %210 = vector.extract_strided_slice %209 {offsets = [0, 0], sizes = [8, 384], strides = [1, 1]} : vector<8x512xf32> to vector<8x384xf32>
    %211 = arith.negf %210 : vector<8x384xf32>
    %212 = math.exp %211 : vector<8x384xf32>
    %cst_57 = arith.constant 1.000000e+00 : f32
    %213 = vector.broadcast %cst_57 : f32 to vector<8x384xf32>
    %214 = arith.addf %213, %212 : vector<8x384xf32>
    %215 = arith.divf %213, %214 : vector<8x384xf32>
    %216 = vector.extract_strided_slice %215 {offsets = [0, 0], sizes = [8, 128], strides = [1, 1]} : vector<8x384xf32> to vector<8x128xf32>
    %217 = vector.extract_strided_slice %215 {offsets = [0, 128], sizes = [8, 128], strides = [1, 1]} : vector<8x384xf32> to vector<8x128xf32>
    %218 = vector.extract_strided_slice %215 {offsets = [0, 256], sizes = [8, 128], strides = [1, 1]} : vector<8x384xf32> to vector<8x128xf32>
    %219 = vector.extract_strided_slice %209 {offsets = [0, 384], sizes = [8, 128], strides = [1, 1]} : vector<8x512xf32> to vector<8x128xf32>
    %220 = math.tanh %219 : vector<8x128xf32>
    %221 = arith.mulf %217, %195 : vector<8x128xf32>
    %222 = arith.mulf %216, %220 : vector<8x128xf32>
    %223 = arith.addf %221, %222 : vector<8x128xf32>
    %224 = math.tanh %223 : vector<8x128xf32>
    %225 = arith.mulf %218, %224 : vector<8x128xf32>
    %226 = arith.truncf %225 : vector<8x128xf32> to vector<8x128xbf16>
    %227 = arith.index_cast %202 : i32 to index
    %c0_58 = arith.constant 0 : index
    %228 = vector.load %arg10[%227, %c0_58] : memref<64x128xbf16, #tpu.memory_space<vmem>>, vector<8x128xbf16>
    tpu.vector_store %arg10[%227, %c0_58], %226 {strides = array<i32>} : memref<64x128xbf16, #tpu.memory_space<vmem>>, vector<8x128xbf16>,
    %c8_i32_59 = arith.constant 8 : i32
    %c0_60 = arith.constant 0 : index
    %c0_61 = arith.constant 0 : index
    %229 = vector.load %arg8[%c0_60, %c0_61] : memref<8x128xf32, #tpu.memory_space<vmem>>, vector<8x128xf32>
    tpu.vector_store %arg8[%c0_60, %c0_61], %225 {strides = array<i32>} : memref<8x128xf32, #tpu.memory_space<vmem>>, vector<8x128xf32>,
    %c0_62 = arith.constant 0 : index
    %c0_63 = arith.constant 0 : index
    %230 = vector.load %arg9[%c0_62, %c0_63] : memref<8x128xf32, #tpu.memory_space<vmem>>, vector<8x128xf32>
    tpu.vector_store %arg9[%c0_62, %c0_63], %223 {strides = array<i32>} : memref<8x128xf32, #tpu.memory_space<vmem>>, vector<8x128xf32>,
    %c0_64 = arith.constant 0 : index
    %c0_65 = arith.constant 0 : index
    %231 = vector.load %arg10[%c0_64, %c0_65] : memref<64x128xbf16, #tpu.memory_space<vmem>>, vector<64x128xbf16>
    %c0_66 = arith.constant 0 : index
    %c0_67 = arith.constant 0 : index
    %232 = vector.load %arg5[%c0_66, %c0_67] : memref<128x128xbf16, #tpu.memory_space<vmem>>, vector<128x128xbf16>
    %cst_68 = arith.constant dense<0.000000e+00> : vector<64x128xf32>
    %233 = tpu.matmul %231, %232, %cst_68 {dimension_numbers = #tpu.dot_dimension_numbers<[1], [0], [0], [1], [0, 0, 1, 1], [], []>} : vector<64x128xbf16>, vector<128x128xbf16>, vector<64x128xf32> -> vector<64x128xf32>
    %c0_69 = arith.constant 0 : index
    %c0_70 = arith.constant 0 : index
    %234 = vector.load %arg6[%c0_69, %c0_70] : memref<1x128xf32, #tpu.memory_space<vmem>>, vector<1x128xf32>
    %235 = vector.broadcast %234 : vector<1x128xf32> to vector<64x128xf32>
    %236 = arith.addf %233, %235 : vector<64x128xf32>
    %c0_71 = arith.constant 0 : index
    %c0_72 = arith.constant 0 : index
    %237 = vector.load %arg7[%c0_71, %c0_72] : memref<64x128xf32, #tpu.memory_space<vmem>>, vector<64x128xf32>
    tpu.vector_store %arg7[%c0_71, %c0_72], %236 {strides = array<i32>} : memref<64x128xf32, #tpu.memory_space<vmem>>, vector<64x128xf32>,
    return
  }
  func.func @transform_0(%arg0: i32) -> (i32, i32) {
    %c0_i32 = arith.constant 0 : i32
    %c0_i32_0 = arith.constant 0 : i32
    return %arg0, %c0_i32 : i32, i32
  }
  func.func @transform_1(%arg0: i32) -> (i32, i32) {
    %c0_i32 = arith.constant 0 : i32
    %c0_i32_0 = arith.constant 0 : i32
    %c0_i32_1 = arith.constant 0 : i32
    return %c0_i32, %c0_i32_0 : i32, i32
  }
  func.func @transform_2(%arg0: i32) -> (i32, i32) {
    %c0_i32 = arith.constant 0 : i32
    %c0_i32_0 = arith.constant 0 : i32
    %c0_i32_1 = arith.constant 0 : i32
    return %c0_i32, %c0_i32_0 : i32, i32
  }
  func.func @transform_3(%arg0: i32) -> (i32, i32) {
    %c0_i32 = arith.constant 0 : i32
    %c0_i32_0 = arith.constant 0 : i32
    %c0_i32_1 = arith.constant 0 : i32
    return %c0_i32, %c0_i32_0 : i32, i32
  }
  func.func @transform_4(%arg0: i32) -> (i32, i32) {
    %c0_i32 = arith.constant 0 : i32
    %c0_i32_0 = arith.constant 0 : i32
    %c0_i32_1 = arith.constant 0 : i32
    return %c0_i32, %c0_i32_0 : i32, i32
  }
  func.func @transform_5(%arg0: i32) -> (i32, i32) {
    %c0_i32 = arith.constant 0 : i32
    %c0_i32_0 = arith.constant 0 : i32
    %c0_i32_1 = arith.constant 0 : i32
    return %c0_i32, %c0_i32_0 : i32, i32
  }
  func.func @transform_6(%arg0: i32) -> (i32, i32) {
    %c0_i32 = arith.constant 0 : i32
    %c0_i32_0 = arith.constant 0 : i32
    return %arg0, %c0_i32 : i32, i32
  }
  func.func @transform_7(%arg0: i32) -> (i32, i32) {
    %c0_i32 = arith.constant 0 : i32
    %c0_i32_0 = arith.constant 0 : i32
    %c0_i32_1 = arith.constant 0 : i32
    return %c0_i32, %c0_i32_0 : i32, i32
  }
  func.func @transform_8(%arg0: i32) -> (i32, i32) {
    %c0_i32 = arith.constant 0 : i32
    %c0_i32_0 = arith.constant 0 : i32
    %c0_i32_1 = arith.constant 0 : i32
    return %c0_i32, %c0_i32_0 : i32, i32
  }
}

</mosaic_0001>

<llo_original>
// kernel: tpu_custom_call.1
$region0: #{tpu_custom_call.1}
  #allocation0 [shape = 'u32[]', space=smem, size = 0x4, offset = 0x4, fixed_abs, tag = 'smem constant byte address 0x4 - core index']
  #allocation1 [shape = 'u32[72,128]{1,0:T(1,128)}', space=vmem, size = 0x9000, scoped, tag = 'internal scratch']
  #allocation2 [shape = 'bf16[64,128]{1,0:T(8,128)(2,1)}', space=vmem, size = 0x4000, scoped, tag = 'scratch operand']
  %s0 = inlined_call_operand.hbm [shape: bf16[64,512], index: 0, kind: input, shape index: {}]
  %s1 = inlined_call_operand.hbm [shape: f32[8,128], index: 1, kind: input, shape index: {}]
  %s2 = inlined_call_operand.hbm [shape: f32[8,128], index: 2, kind: input, shape index: {}]
  %s3 = inlined_call_operand.hbm [shape: bf16[128,512], index: 3, kind: input, shape index: {}]
  %s4 = inlined_call_operand.hbm [shape: bf16[128,128], index: 4, kind: input, shape index: {}]
  %s5 = inlined_call_operand.vmem [shape: f32[1,128], index: 5, kind: input, shape index: {}]
  %s6 = inlined_call_operand.hbm [shape: f32[64,128], index: 6, kind: output, shape index: {0}]
  %s7 = inlined_call_operand.hbm [shape: f32[8,128], index: 7, kind: output, shape index: {1}]
  %s8 = inlined_call_operand.hbm [shape: f32[8,128], index: 8, kind: output, shape index: {2}]
  %9 = xla_tuple %s6, %s7, %s8
  %s10 = sld [smem:[#allocation0]]
  $region74: #{tpu_custom_call.1} parent=0
    _
  %s12 = ssub.s32 1, %s10
  %s13 = scalar_select 0, %s12, %s10
  $region1: #{tpu_custom_call.1} parent=0
    #allocation3 [shape = 'u8[65536]{0}', space=vmem, size = 0x10000, scoped, tag = 'input window, operand 0, single buffered']
    #allocation4 [shape = 's32[1]{0}', space=sflag, size = 0x4, scoped, tag = 'scoped memory for tpu_custom_call.1']
    #allocation5 [shape = 's32[1]{0}', space=sflag, size = 0x4, scoped, tag = 'scoped memory for tpu_custom_call.1']
    #allocation6 [shape = 'u8[4096]{0}', space=vmem, size = 0x1000, scoped, tag = 'input window, operand 1, single buffered']
    #allocation7 [shape = 's32[1]{0}', space=sflag, size = 0x4, scoped, tag = 'scoped memory for tpu_custom_call.1']
    #allocation8 [shape = 'u8[4096]{0}', space=vmem, size = 0x1000, scoped, tag = 'input window, operand 2, single buffered']
    #allocation9 [shape = 'u8[131072]{0}', space=vmem, size = 0x20000, scoped, tag = 'input window, operand 3, single buffered']
    #allocation10 [shape = 's32[1]{0}', space=sflag, size = 0x4, scoped, tag = 'scoped memory for tpu_custom_call.1']
    #allocation11 [shape = 'u8[32768]{0}', space=vmem, size = 0x8000, scoped, tag = 'input window, operand 4, single buffered']
    #allocation12 [shape = 'u8[32768]{0}', space=vmem, size = 0x8000, scoped, tag = 'output window, operand 0, single buffered']
    #allocation13 [shape = 'u8[4096]{0}', space=vmem, size = 0x1000, scoped, tag = 'output window, operand 1, single buffered']
    #allocation14 [shape = 's32[1]{0}', space=sflag, size = 0x4, scoped, tag = 'scoped memory for tpu_custom_call.1']
    #allocation15 [shape = 'u8[4096]{0}', space=vmem, size = 0x1000, scoped, tag = 'output window, operand 2, single buffered']
    %14 = vsyncpa [#allocation4], 0
    %15 = vsyncpa [#allocation7], 0
    %16 = vsyncpa [#allocation10], 0
    %17 = vsyncpa [#allocation5], 0
    %18 = vsyncpa [#allocation14], 0
    // Predicated region
    $region2: #{tpu_custom_call.1} parent=1 // pred_check
      _
    $region3: #{tpu_custom_call.1} parent=1 // pred_check_branch
      %20 = sbr.rel (0) target = $region5
    $region4: #{tpu_custom_call.1} parent=1 // pred_region
      %22 = vsyncadd [#allocation4], 0
      %s23 = sshll.u32 %s0, 4
      %s24 = int_to_ptr.hbm [resolvable:$true] %s23
      %s25 = sshll.u32 [#allocation3], 4
      %s26 = int_to_ptr.vmem [resolvable:$true] %s25
      %31 = dma.hbm_to_vmem [thread:$0]  %s24, 2048, %s26, [#allocation4], 256, 256, 16
    $region5: #{tpu_custom_call.1} parent=1 // pred_fallthru
      _
    // Predicated region
    $region6: #{tpu_custom_call.1} parent=1 // pred_check
      _
    $region7: #{tpu_custom_call.1} parent=1 // pred_check_branch
      %33 = sbr.rel (0) target = $region9
    $region8: #{tpu_custom_call.1} parent=1 // pred_region
      %35 = vsyncadd [#allocation7], 0
      %s37 = sshll.u32 %s1, 4
      %s38 = int_to_ptr.hbm [resolvable:$true] %s37
      %s39 = sshll.u32 [#allocation6], 4
      %s40 = int_to_ptr.vmem [resolvable:$true] %s39
      %42 = dma.hbm_to_vmem [thread:$0]  %s38, 128, %s40, [#allocation7]
    $region9: #{tpu_custom_call.1} parent=1 // pred_fallthru
      _
    // Predicated region
    $region10: #{tpu_custom_call.1} parent=1 // pred_check
      _
    $region11: #{tpu_custom_call.1} parent=1 // pred_check_branch
      %44 = sbr.rel (0) target = $region13
    $region12: #{tpu_custom_call.1} parent=1 // pred_region
      %46 = vsyncadd [#allocation7], 0
      %s48 = sshll.u32 %s2, 4
      %s49 = int_to_ptr.hbm [resolvable:$true] %s48
      %s50 = sshll.u32 [#allocation8], 4
      %s51 = int_to_ptr.vmem [resolvable:$true] %s50
      %53 = dma.hbm_to_vmem [thread:$0]  %s49, 128, %s51, [#allocation7]
    $region13: #{tpu_custom_call.1} parent=1 // pred_fallthru
      _
    // Predicated region
    $region14: #{tpu_custom_call.1} parent=1 // pred_check
      _
    $region15: #{tpu_custom_call.1} parent=1 // pred_check_branch
      %55 = sbr.rel (0) target = $region17
    $region16: #{tpu_custom_call.1} parent=1 // pred_region
      %57 = vsyncadd [#allocation10], 0
      %s58 = sshll.u32 %s3, 4
      %s59 = int_to_ptr.hbm [resolvable:$true] %s58
      %s60 = sshll.u32 [#allocation9], 4
      %s61 = int_to_ptr.vmem [resolvable:$true] %s60
      %66 = dma.hbm_to_vmem [thread:$0]  %s59, 4096, %s61, [#allocation10], 256, 256, 16
    $region17: #{tpu_custom_call.1} parent=1 // pred_fallthru
      _
    // Predicated region
    $region18: #{tpu_custom_call.1} parent=1 // pred_check
      _
    $region19: #{tpu_custom_call.1} parent=1 // pred_check_branch
      %68 = sbr.rel (0) target = $region21
    $region20: #{tpu_custom_call.1} parent=1 // pred_region
      %70 = vsyncadd [#allocation10], 0
      %s71 = sshll.u32 %s4, 4
      %s72 = int_to_ptr.hbm [resolvable:$true] %s71
      %s73 = sshll.u32 [#allocation11], 4
      %s74 = int_to_ptr.vmem [resolvable:$true] %s73
      %79 = dma.hbm_to_vmem [thread:$0]  %s72, 1024, %s74, [#allocation10], 64, 64, 4
    $region21: #{tpu_custom_call.1} parent=1 // pred_fallthru
      _
    // Predicated region
    $region22: #{tpu_custom_call.1} parent=1 // pred_check
      _
    $region23: #{tpu_custom_call.1} parent=1 // pred_check_branch
      %81 = sbr.rel (0) target = $region25
    $region24: #{tpu_custom_call.1} parent=1 // pred_region
      _
    $region25: #{tpu_custom_call.1} parent=1 // pred_fallthru
      _
    // Predicated region
    $region26: #{tpu_custom_call.1} parent=1 // pred_check
      _
    $region27: #{tpu_custom_call.1} parent=1 // pred_check_branch
      %83 = sbr.rel (0) target = $region29
    $region28: #{tpu_custom_call.1} parent=1 // pred_region
      %85 = dma.done [#allocation4], 2048
    $region29: #{tpu_custom_call.1} parent=1 // pred_fallthru
      _
    // Predicated region
    $region30: #{tpu_custom_call.1} parent=1 // pred_check
      _
    $region31: #{tpu_custom_call.1} parent=1 // pred_check_branch
      %87 = sbr.rel (0) target = $region33
    $region32: #{tpu_custom_call.1} parent=1 // pred_region
      %89 = dma.done [#allocation7], 128
    $region33: #{tpu_custom_call.1} parent=1 // pred_fallthru
      _
    // Predicated region
    $region34: #{tpu_custom_call.1} parent=1 // pred_check
      _
    $region35: #{tpu_custom_call.1} parent=1 // pred_check_branch
      %91 = sbr.rel (0) target = $region37
    $region36: #{tpu_custom_call.1} parent=1 // pred_region
      %93 = dma.done [#allocation7], 128
    $region37: #{tpu_custom_call.1} parent=1 // pred_fallthru
      _
    // Predicated region
    $region38: #{tpu_custom_call.1} parent=1 // pred_check
      _
    $region39: #{tpu_custom_call.1} parent=1 // pred_check_branch
      %95 = sbr.rel (0) target = $region41
    $region40: #{tpu_custom_call.1} parent=1 // pred_region
      %97 = dma.done [#allocation10], 4096
    $region41: #{tpu_custom_call.1} parent=1 // pred_fallthru
      _
    // Predicated region
    $region42: #{tpu_custom_call.1} parent=1 // pred_check
      _
    $region43: #{tpu_custom_call.1} parent=1 // pred_check_branch
      %99 = sbr.rel (0) target = $region45
    $region44: #{tpu_custom_call.1} parent=1 // pred_region
      %101 = dma.done [#allocation10], 1024
    $region45: #{tpu_custom_call.1} parent=1 // pred_fallthru
      _
    %p102 = scmp.eq.s32.totalorder 0, 0
    // Predicated region
    $region46: #{tpu_custom_call.1} parent=1 // pred_check
      %p103 = pneg %p102
    $region47: #{tpu_custom_call.1} parent=1 // pred_check_branch
      %105 = sbr.rel (%p103) target = $region49
    $region48: #{tpu_custom_call.1} parent=1 // pred_region
      %v106 = vld [vmem:[#allocation6] sm:$0xff]
      %107 = vst [vmem:[#allocation13] sm:$0xff] %v106
      %v108 = vld [vmem:[#allocation8] sm:$0xff]
      %109 = vst [vmem:[#allocation15] sm:$0xff] %v108
    $region49: #{tpu_custom_call.1} parent=1 // pred_fallthru
      _
    %v110 = vld [vmem:[#allocation13] sm:$0xff]
    %v111 = vld [vmem:[#allocation15] sm:$0xff]
    %s112 = smul.u32 0, 4
    %s113 = smul.addr %s112, 4
    %s114 = scalar_lea.vmem [#allocation3], %s113
    %v115 = vld [vmem:[%s114] sm:$0xff]
    %v116 = vld [vmem:[%s114 + $0x8] sm:$0xff]
    %v117 = vunpack.c.l.bf16 %v115
    %v118 = vunpack.c.h.bf16 %v115
    %v119 = vunpack.c.l.bf16 %v116
    %v120 = vunpack.c.h.bf16 %v116
    %v121 = vpack.c.bf16 %v110, %v110
    %v122 = vld [vmem:[#allocation9] sm:$0xff]
    %v123 = vld [vmem:[#allocation9 + $0x8] sm:$0xff]
    %v124 = vld [vmem:[#allocation9 + $0x10] sm:$0xff]
    %v125 = vld [vmem:[#allocation9 + $0x18] sm:$0xff]
    %v126 = vld [vmem:[#allocation9 + $0x20] sm:$0xff]
    %v127 = vld [vmem:[#allocation9 + $0x28] sm:$0xff]
    %v128 = vld [vmem:[#allocation9 + $0x30] sm:$0xff]
    %v129 = vld [vmem:[#allocation9 + $0x38] sm:$0xff]
    %v130 = vld [vmem:[#allocation9 + $0x40] sm:$0xff]
    %v131 = vld [vmem:[#allocation9 + $0x48] sm:$0xff]
    %v132 = vld [vmem:[#allocation9 + $0x50] sm:$0xff]
    %v133 = vld [vmem:[#allocation9 + $0x58] sm:$0xff]
    %v134 = vld [vmem:[#allocation9 + $0x60] sm:$0xff]
    %v135 = vld [vmem:[#allocation9 + $0x68] sm:$0xff]
    %v136 = vld [vmem:[#allocation9 + $0x70] sm:$0xff]
    %v137 = vld [vmem:[#allocation9 + $0x78] sm:$0xff]
    %v138 = vld [vmem:[#allocation9 + $0x80] sm:$0xff]
    %v139 = vld [vmem:[#allocation9 + $0x88] sm:$0xff]
    %v140 = vld [vmem:[#allocation9 + $0x90] sm:$0xff]
    %v141 = vld [vmem:[#allocation9 + $0x98] sm:$0xff]
    %v142 = vld [vmem:[#allocation9 + $0xa0] sm:$0xff]
    %v143 = vld [vmem:[#allocation9 + $0xa8] sm:$0xff]
    %v144 = vld [vmem:[#allocation9 + $0xb0] sm:$0xff]
    %v145 = vld [vmem:[#allocation9 + $0xb8] sm:$0xff]
    %v146 = vld [vmem:[#allocation9 + $0xc0] sm:$0xff]
    %v147 = vld [vmem:[#allocation9 + $0xc8] sm:$0xff]
    %v148 = vld [vmem:[#allocation9 + $0xd0] sm:$0xff]
    %v149 = vld [vmem:[#allocation9 + $0xd8] sm:$0xff]
    %v150 = vld [vmem:[#allocation9 + $0xe0] sm:$0xff]
    %v151 = vld [vmem:[#allocation9 + $0xe8] sm:$0xff]
    %v152 = vld [vmem:[#allocation9 + $0xf0] sm:$0xff]
    %v153 = vld [vmem:[#allocation9 + $0xf8] sm:$0xff]
    %v186 = vunpack.c.l.b16 %v122
    %v187 = vunpack.c.h.b16 %v122
    %v188 = vunpack.c.l.b16 %v123
    %v189 = vunpack.c.h.b16 %v123
    %v190 = vunpack.c.l.b16 %v124
    %v191 = vunpack.c.h.b16 %v124
    %v192 = vunpack.c.l.b16 %v125
    %v193 = vunpack.c.h.b16 %v125
    %v194 = vunpack.c.l.b16 %v126
    %v195 = vunpack.c.h.b16 %v126
    %v196 = vunpack.c.l.b16 %v127
    %v197 = vunpack.c.h.b16 %v127
    %v198 = vunpack.c.l.b16 %v128
    %v199 = vunpack.c.h.b16 %v128
    %v200 = vunpack.c.l.b16 %v129
    %v201 = vunpack.c.h.b16 %v129
    %v202 = vunpack.c.l.b16 %v130
    %v203 = vunpack.c.h.b16 %v130
    %v204 = vunpack.c.l.b16 %v131
    %v205 = vunpack.c.h.b16 %v131
    %v206 = vunpack.c.l.b16 %v132
    %v207 = vunpack.c.h.b16 %v132
    %v208 = vunpack.c.l.b16 %v133
    %v209 = vunpack.c.h.b16 %v133
    %v210 = vunpack.c.l.b16 %v134
    %v211 = vunpack.c.h.b16 %v134
    %v212 = vunpack.c.l.b16 %v135
    %v213 = vunpack.c.h.b16 %v135
    %v214 = vunpack.c.l.b16 %v136
    %v215 = vunpack.c.h.b16 %v136
    %v216 = vunpack.c.l.b16 %v137
    %v217 = vunpack.c.h.b16 %v137
    %v218 = vunpack.c.l.b16 %v138
    %v219 = vunpack.c.h.b16 %v138
    %v220 = vunpack.c.l.b16 %v139
    %v221 = vunpack.c.h.b16 %v139
    %v222 = vunpack.c.l.b16 %v140
    %v223 = vunpack.c.h.b16 %v140
    %v224 = vunpack.c.l.b16 %v141
    %v225 = vunpack.c.h.b16 %v141
    %v226 = vunpack.c.l.b16 %v142
    %v227 = vunpack.c.h.b16 %v142
    %v228 = vunpack.c.l.b16 %v143
    %v229 = vunpack.c.h.b16 %v143
    %v230 = vunpack.c.l.b16 %v144
    %v231 = vunpack.c.h.b16 %v144
    %v232 = vunpack.c.l.b16 %v145
    %v233 = vunpack.c.h.b16 %v145
    %v234 = vunpack.c.l.b16 %v146
    %v235 = vunpack.c.h.b16 %v146
    %v236 = vunpack.c.l.b16 %v147
    %v237 = vunpack.c.h.b16 %v147
    %v238 = vunpack.c.l.b16 %v148
    %v239 = vunpack.c.h.b16 %v148
    %v240 = vunpack.c.l.b16 %v149
    %v241 = vunpack.c.h.b16 %v149
    %v242 = vunpack.c.l.b16 %v150
    %v243 = vunpack.c.h.b16 %v150
    %v244 = vunpack.c.l.b16 %v151
    %v245 = vunpack.c.h.b16 %v151
    %v246 = vunpack.c.l.b16 %v152
    %v247 = vunpack.c.h.b16 %v152
    %v248 = vunpack.c.l.b16 %v153
    %v249 = vunpack.c.h.b16 %v153
    %v250 = vpack.c.b16 %v190, %v186
    %v251 = vpack.c.b16 %v191, %v187
    %v252 = vpack.c.b16 %v192, %v188
    %v253 = vpack.c.b16 %v193, %v189
    %v254 = vpack.c.b16 %v198, %v194
    %v255 = vpack.c.b16 %v199, %v195
    %v256 = vpack.c.b16 %v200, %v196
    %v257 = vpack.c.b16 %v201, %v197
    %v258 = vpack.c.b16 %v206, %v202
    %v259 = vpack.c.b16 %v207, %v203
    %v260 = vpack.c.b16 %v208, %v204
    %v261 = vpack.c.b16 %v209, %v205
    %v262 = vpack.c.b16 %v214, %v210
    %v263 = vpack.c.b16 %v215, %v211
    %v264 = vpack.c.b16 %v216, %v212
    %v265 = vpack.c.b16 %v217, %v213
    %v266 = vpack.c.b16 %v222, %v218
    %v267 = vpack.c.b16 %v223, %v219
    %v268 = vpack.c.b16 %v224, %v220
    %v269 = vpack.c.b16 %v225, %v221
    %v270 = vpack.c.b16 %v230, %v226
    %v271 = vpack.c.b16 %v231, %v227
    %v272 = vpack.c.b16 %v232, %v228
    %v273 = vpack.c.b16 %v233, %v229
    %v274 = vpack.c.b16 %v238, %v234
    %v275 = vpack.c.b16 %v239, %v235
    %v276 = vpack.c.b16 %v240, %v236
    %v277 = vpack.c.b16 %v241, %v237
    %v278 = vpack.c.b16 %v246, %v242
    %v279 = vpack.c.b16 %v247, %v243
    %v280 = vpack.c.b16 %v248, %v244
    %v281 = vpack.c.b16 %v249, %v245
    %314 = vmatpush.bf16.msra.mxu0 %v278
    %315 = vmatpush.bf16.msra.mxu0 %v274
    %316 = vmatpush.bf16.msra.mxu0 %v270
    %317 = vmatpush.bf16.msra.mxu0 %v266
    %318 = vmatpush.bf16.msra.mxu0 %v262
    %319 = vmatpush.bf16.msra.mxu0 %v258
    %320 = vmatpush.bf16.msra.mxu0 %v254
    %321 = vmatpush.bf16.msra.mxu0 %v250
    %322 = vmatmul.bf16.gmra.mxu0 %v121
    %v323 = vpop.f32.mrf.mxu0
    %v324 = vadd.f32 0.0, %v323
    %v325 = vpop.f32.mrf.mxu0
    %326 = vdwg.mxu0
    %327 = vmatpush.bf16.msra.mxu0 %v279
    %328 = vmatpush.bf16.msra.mxu0 %v275
    %329 = vmatpush.bf16.msra.mxu0 %v271
    %330 = vmatpush.bf16.msra.mxu0 %v267
    %331 = vmatpush.bf16.msra.mxu0 %v263
    %332 = vmatpush.bf16.msra.mxu0 %v259
    %333 = vmatpush.bf16.msra.mxu0 %v255
    %334 = vmatpush.bf16.msra.mxu0 %v251
    %335 = vmatmul.bf16.gmra.mxu0 %v121
    %v336 = vpop.f32.mrf.mxu0
    %v337 = vadd.f32 0.0, %v336
    %v338 = vpop.f32.mrf.mxu0
    %339 = vdwg.mxu0
    %340 = vmatpush.bf16.msra.mxu0 %v280
    %341 = vmatpush.bf16.msra.mxu0 %v276
    %342 = vmatpush.bf16.msra.mxu0 %v272
    %343 = vmatpush.bf16.msra.mxu0 %v268
    %344 = vmatpush.bf16.msra.mxu0 %v264
    %345 = vmatpush.bf16.msra.mxu0 %v260
    %346 = vmatpush.bf16.msra.mxu0 %v256
    %347 = vmatpush.bf16.msra.mxu0 %v252
    %348 = vmatmul.bf16.gmra.mxu0 %v121
    %v349 = vpop.f32.mrf.mxu0
    %v350 = vadd.f32 0.0, %v349
    %v351 = vpop.f32.mrf.mxu0
    %352 = vdwg.mxu0
    %353 = vmatpush.bf16.msra.mxu0 %v281
    %354 = vmatpush.bf16.msra.mxu0 %v277
    %355 = vmatpush.bf16.msra.mxu0 %v273
    %356 = vmatpush.bf16.msra.mxu0 %v269
    %357 = vmatpush.bf16.msra.mxu0 %v265
    %358 = vmatpush.bf16.msra.mxu0 %v261
    %359 = vmatpush.bf16.msra.mxu0 %v257
    %360 = vmatpush.bf16.msra.mxu0 %v253
    %361 = vmatmul.bf16.gmra.mxu0 %v121
    %v362 = vpop.f32.mrf.mxu0
    %v363 = vadd.f32 0.0, %v362
    %v364 = vpop.f32.mrf.mxu0
    %365 = vdwg.mxu0
    %v366 = vadd.f32 %v117, %v324
    %v367 = vadd.f32 %v118, %v337
    %v368 = vadd.f32 %v119, %v350
    %v369 = vadd.f32 %v120, %v363
    %v370 = vxor.u32 %v366, 2147483648
    %v371 = vxor.u32 %v367, 2147483648
    %v372 = vxor.u32 %v368, 2147483648
    %v373 = vmul.f32 %v370, 1.442695
    %v374 = vpow.pop %v373
    %v375 = vmul.f32 %v371, 1.442695
    %v376 = vpow.pop %v375
    %v377 = vmul.f32 %v372, 1.442695
    %v378 = vpow.pop %v377
    %v379 = vadd.f32 %v374, 1.0
    %v380 = vadd.f32 %v376, 1.0
    %v381 = vadd.f32 %v378, 1.0
    %v382 = vrcp.pop %v379
    %v383 = vmul.f32 %v379, %v382
    %v384 = vsub.f32 1.0, %v383
    %v385 = vmul.f32 %v382, %v384
    %v386 = vadd.f32 %v382, %v385
    %vm387 = vweird.f32 %v379
    %vm388 = vweird.f32 %v382
    %vm389 = vmor %vm387, %vm388
    %v390 = vsel %vm389, %v382, %v386
    %v391 = vand.u32 2147483647, %v379
    %vm392 = vcmp.eq.f32.partialorder %v391, 8.507059e+37
    %v393 = vand.u32 %v379, 2147483648
    %v394 = vor.u32 1.1754944e-38, %v393
    %v395 = vsel %vm392, %v394, %v390
    %v396 = vmul.f32 1.0, %v395
    %v397 = vrcp.pop %v380
    %v398 = vmul.f32 %v380, %v397
    %v399 = vsub.f32 1.0, %v398
    %v400 = vmul.f32 %v397, %v399
    %v401 = vadd.f32 %v397, %v400
    %vm402 = vweird.f32 %v380
    %vm403 = vweird.f32 %v397
    %vm404 = vmor %vm402, %vm403
    %v405 = vsel %vm404, %v397, %v401
    %v406 = vand.u32 2147483647, %v380
    %vm407 = vcmp.eq.f32.partialorder %v406, 8.507059e+37
    %v408 = vand.u32 %v380, 2147483648
    %v409 = vor.u32 1.1754944e-38, %v408
    %v410 = vsel %vm407, %v409, %v405
    %v411 = vmul.f32 1.0, %v410
    %v412 = vrcp.pop %v381
    %v413 = vmul.f32 %v381, %v412
    %v414 = vsub.f32 1.0, %v413
    %v415 = vmul.f32 %v412, %v414
    %v416 = vadd.f32 %v412, %v415
    %vm417 = vweird.f32 %v381
    %vm418 = vweird.f32 %v412
    %vm419 = vmor %vm417, %vm418
    %v420 = vsel %vm419, %v412, %v416
    %v421 = vand.u32 2147483647, %v381
    %vm422 = vcmp.eq.f32.partialorder %v421, 8.507059e+37
    %v423 = vand.u32 %v381, 2147483648
    %v424 = vor.u32 1.1754944e-38, %v423
    %v425 = vsel %vm422, %v424, %v420
    %v426 = vmul.f32 1.0, %v425
    %v427 = vtanh.pop %v369
    %v428 = vmul.f32 %v411, %v111
    %v429 = vmul.f32 %v396, %v427
    %v430 = vadd.f32 %v428, %v429
    %v431 = vtanh.pop %v430
    %v432 = vmul.f32 %v426, %v431
    %v433 = vpack.c.bf16 %v432, %v432
    %434 = vst [vmem:[#allocation2] sm:$0xf] %v433
    %s435 = smul.u32 1, 4
    %s436 = smul.addr %s435, 4
    %s437 = scalar_lea.vmem [#allocation3], %s436
    %v438 = vld [vmem:[%s437] sm:$0xff]
    %v439 = vld [vmem:[%s437 + $0x8] sm:$0xff]
    %v440 = vunpack.c.l.bf16 %v438
    %v441 = vunpack.c.h.bf16 %v438
    %v442 = vunpack.c.l.bf16 %v439
    %v443 = vunpack.c.h.bf16 %v439
    %v444 = vld [vmem:[#allocation9] sm:$0xff]
    %v445 = vld [vmem:[#allocation9 + $0x8] sm:$0xff]
    %v446 = vld [vmem:[#allocation9 + $0x10] sm:$0xff]
    %v447 = vld [vmem:[#allocation9 + $0x18] sm:$0xff]
    %v448 = vld [vmem:[#allocation9 + $0x20] sm:$0xff]
    %v449 = vld [vmem:[#allocation9 + $0x28] sm:$0xff]
    %v450 = vld [vmem:[#allocation9 + $0x30] sm:$0xff]
    %v451 = vld [vmem:[#allocation9 + $0x38] sm:$0xff]
    %v452 = vld [vmem:[#allocation9 + $0x40] sm:$0xff]
    %v453 = vld [vmem:[#allocation9 + $0x48] sm:$0xff]
    %v454 = vld [vmem:[#allocation9 + $0x50] sm:$0xff]
    %v455 = vld [vmem:[#allocation9 + $0x58] sm:$0xff]
    %v456 = vld [vmem:[#allocation9 + $0x60] sm:$0xff]
    %v457 = vld [vmem:[#allocation9 + $0x68] sm:$0xff]
    %v458 = vld [vmem:[#allocation9 + $0x70] sm:$0xff]
    %v459 = vld [vmem:[#allocation9 + $0x78] sm:$0xff]
    %v460 = vld [vmem:[#allocation9 + $0x80] sm:$0xff]
    %v461 = vld [vmem:[#allocation9 + $0x88] sm:$0xff]
    %v462 = vld [vmem:[#allocation9 + $0x90] sm:$0xff]
    %v463 = vld [vmem:[#allocation9 + $0x98] sm:$0xff]
    %v464 = vld [vmem:[#allocation9 + $0xa0] sm:$0xff]
    %v465 = vld [vmem:[#allocation9 + $0xa8] sm:$0xff]
    %v466 = vld [vmem:[#allocation9 + $0xb0] sm:$0xff]
    %v467 = vld [vmem:[#allocation9 + $0xb8] sm:$0xff]
    %v468 = vld [vmem:[#allocation9 + $0xc0] sm:$0xff]
    %v469 = vld [vmem:[#allocation9 + $0xc8] sm:$0xff]
    %v470 = vld [vmem:[#allocation9 + $0xd0] sm:$0xff]
    %v471 = vld [vmem:[#allocation9 + $0xd8] sm:$0xff]
    %v472 = vld [vmem:[#allocation9 + $0xe0] sm:$0xff]
    %v473 = vld [vmem:[#allocation9 + $0xe8] sm:$0xff]
    %v474 = vld [vmem:[#allocation9 + $0xf0] sm:$0xff]
    %v475 = vld [vmem:[#allocation9 + $0xf8] sm:$0xff]
    %v508 = vunpack.c.l.b16 %v444
    %v509 = vunpack.c.h.b16 %v444
    %v510 = vunpack.c.l.b16 %v445
    %v511 = vunpack.c.h.b16 %v445
    %v512 = vunpack.c.l.b16 %v446
    %v513 = vunpack.c.h.b16 %v446
    %v514 = vunpack.c.l.b16 %v447
    %v515 = vunpack.c.h.b16 %v447
    %v516 = vunpack.c.l.b16 %v448
    %v517 = vunpack.c.h.b16 %v448
    %v518 = vunpack.c.l.b16 %v449
    %v519 = vunpack.c.h.b16 %v449
    %v520 = vunpack.c.l.b16 %v450
    %v521 = vunpack.c.h.b16 %v450
    %v522 = vunpack.c.l.b16 %v451
    %v523 = vunpack.c.h.b16 %v451
    %v524 = vunpack.c.l.b16 %v452
    %v525 = vunpack.c.h.b16 %v452
    %v526 = vunpack.c.l.b16 %v453
    %v527 = vunpack.c.h.b16 %v453
    %v528 = vunpack.c.l.b16 %v454
    %v529 = vunpack.c.h.b16 %v454
    %v530 = vunpack.c.l.b16 %v455
    %v531 = vunpack.c.h.b16 %v455
    %v532 = vunpack.c.l.b16 %v456
    %v533 = vunpack.c.h.b16 %v456
    %v534 = vunpack.c.l.b16 %v457
    %v535 = vunpack.c.h.b16 %v457
    %v536 = vunpack.c.l.b16 %v458
    %v537 = vunpack.c.h.b16 %v458
    %v538 = vunpack.c.l.b16 %v459
    %v539 = vunpack.c.h.b16 %v459
    %v540 = vunpack.c.l.b16 %v460
    %v541 = vunpack.c.h.b16 %v460
    %v542 = vunpack.c.l.b16 %v461
    %v543 = vunpack.c.h.b16 %v461
    %v544 = vunpack.c.l.b16 %v462
    %v545 = vunpack.c.h.b16 %v462
    %v546 = vunpack.c.l.b16 %v463
    %v547 = vunpack.c.h.b16 %v463
    %v548 = vunpack.c.l.b16 %v464
    %v549 = vunpack.c.h.b16 %v464
    %v550 = vunpack.c.l.b16 %v465
    %v551 = vunpack.c.h.b16 %v465
    %v552 = vunpack.c.l.b16 %v466
    %v553 = vunpack.c.h.b16 %v466
    %v554 = vunpack.c.l.b16 %v467
    %v555 = vunpack.c.h.b16 %v467
    %v556 = vunpack.c.l.b16 %v468
    %v557 = vunpack.c.h.b16 %v468
    %v558 = vunpack.c.l.b16 %v469
    %v559 = vunpack.c.h.b16 %v469
    %v560 = vunpack.c.l.b16 %v470
    %v561 = vunpack.c.h.b16 %v470
    %v562 = vunpack.c.l.b16 %v471
    %v563 = vunpack.c.h.b16 %v471
    %v564 = vunpack.c.l.b16 %v472
    %v565 = vunpack.c.h.b16 %v472
    %v566 = vunpack.c.l.b16 %v473
    %v567 = vunpack.c.h.b16 %v473
    %v568 = vunpack.c.l.b16 %v474
    %v569 = vunpack.c.h.b16 %v474
    %v570 = vunpack.c.l.b16 %v475
    %v571 = vunpack.c.h.b16 %v475
    %v572 = vpack.c.b16 %v512, %v508
    %v573 = vpack.c.b16 %v513, %v509
    %v574 = vpack.c.b16 %v514, %v510
    %v575 = vpack.c.b16 %v515, %v511
    %v576 = vpack.c.b16 %v520, %v516
    %v577 = vpack.c.b16 %v521, %v517
    %v578 = vpack.c.b16 %v522, %v518
    %v579 = vpack.c.b16 %v523, %v519
    %v580 = vpack.c.b16 %v528, %v524
    %v581 = vpack.c.b16 %v529, %v525
    %v582 = vpack.c.b16 %v530, %v526
    %v583 = vpack.c.b16 %v531, %v527
    %v584 = vpack.c.b16 %v536, %v532
    %v585 = vpack.c.b16 %v537, %v533
    %v586 = vpack.c.b16 %v538, %v534
    %v587 = vpack.c.b16 %v539, %v535
    %v588 = vpack.c.b16 %v544, %v540
    %v589 = vpack.c.b16 %v545, %v541
    %v590 = vpack.c.b16 %v546, %v542
    %v591 = vpack.c.b16 %v547, %v543
    %v592 = vpack.c.b16 %v552, %v548
    %v593 = vpack.c.b16 %v553, %v549
    %v594 = vpack.c.b16 %v554, %v550
    %v595 = vpack.c.b16 %v555, %v551
    %v596 = vpack.c.b16 %v560, %v556
    %v597 = vpack.c.b16 %v561, %v557
    %v598 = vpack.c.b16 %v562, %v558
    %v599 = vpack.c.b16 %v563, %v559
    %v600 = vpack.c.b16 %v568, %v564
    %v601 = vpack.c.b16 %v569, %v565
    %v602 = vpack.c.b16 %v570, %v566
    %v603 = vpack.c.b16 %v571, %v567
    %636 = vmatpush.bf16.msra.mxu0 %v600
    %637 = vmatpush.bf16.msra.mxu0 %v596
    %638 = vmatpush.bf16.msra.mxu0 %v592
    %639 = vmatpush.bf16.msra.mxu0 %v588
    %640 = vmatpush.bf16.msra.mxu0 %v584
    %641 = vmatpush.bf16.msra.mxu0 %v580
    %642 = vmatpush.bf16.msra.mxu0 %v576
    %643 = vmatpush.bf16.msra.mxu0 %v572
    %644 = vmatmul.bf16.gmra.mxu0 %v433
    %v645 = vpop.f32.mrf.mxu0
    %v646 = vadd.f32 0.0, %v645
    %v647 = vpop.f32.mrf.mxu0
    %648 = vdwg.mxu0
    %649 = vmatpush.bf16.msra.mxu0 %v601
    %650 = vmatpush.bf16.msra.mxu0 %v597
    %651 = vmatpush.bf16.msra.mxu0 %v593
    %652 = vmatpush.bf16.msra.mxu0 %v589
    %653 = vmatpush.bf16.msra.mxu0 %v585
    %654 = vmatpush.bf16.msra.mxu0 %v581
    %655 = vmatpush.bf16.msra.mxu0 %v577
    %656 = vmatpush.bf16.msra.mxu0 %v573
    %657 = vmatmul.bf16.gmra.mxu0 %v433
    %v658 = vpop.f32.mrf.mxu0
    %v659 = vadd.f32 0.0, %v658
    %v660 = vpop.f32.mrf.mxu0
    %661 = vdwg.mxu0
    %662 = vmatpush.bf16.msra.mxu0 %v602
    %663 = vmatpush.bf16.msra.mxu0 %v598
    %664 = vmatpush.bf16.msra.mxu0 %v594
    %665 = vmatpush.bf16.msra.mxu0 %v590
    %666 = vmatpush.bf16.msra.mxu0 %v586
    %667 = vmatpush.bf16.msra.mxu0 %v582
    %668 = vmatpush.bf16.msra.mxu0 %v578
    %669 = vmatpush.bf16.msra.mxu0 %v574
    %670 = vmatmul.bf16.gmra.mxu0 %v433
    %v671 = vpop.f32.mrf.mxu0
    %v672 = vadd.f32 0.0, %v671
    %v673 = vpop.f32.mrf.mxu0
    %674 = vdwg.mxu0
    %675 = vmatpush.bf16.msra.mxu0 %v603
    %676 = vmatpush.bf16.msra.mxu0 %v599
    %677 = vmatpush.bf16.msra.mxu0 %v595
    %678 = vmatpush.bf16.msra.mxu0 %v591
    %679 = vmatpush.bf16.msra.mxu0 %v587
    %680 = vmatpush.bf16.msra.mxu0 %v583
    %681 = vmatpush.bf16.msra.mxu0 %v579
    %682 = vmatpush.bf16.msra.mxu0 %v575
    %683 = vmatmul.bf16.gmra.mxu0 %v433
    %v684 = vpop.f32.mrf.mxu0
    %v685 = vadd.f32 0.0, %v684
    %v686 = vpop.f32.mrf.mxu0
    %687 = vdwg.mxu0
    %v688 = vadd.f32 %v440, %v646
    %v689 = vadd.f32 %v441, %v659
    %v690 = vadd.f32 %v442, %v672
    %v691 = vadd.f32 %v443, %v685
    %v692 = vxor.u32 %v688, 2147483648
    %v693 = vxor.u32 %v689, 2147483648
    %v694 = vxor.u32 %v690, 2147483648
    %v695 = vmul.f32 %v692, 1.442695
    %v696 = vpow.pop %v695
    %v697 = vmul.f32 %v693, 1.442695
    %v698 = vpow.pop %v697
    %v699 = vmul.f32 %v694, 1.442695
    %v700 = vpow.pop %v699
    %v701 = vadd.f32 %v696, 1.0
    %v702 = vadd.f32 %v698, 1.0
    %v703 = vadd.f32 %v700, 1.0
    %v704 = vrcp.pop %v701
    %v705 = vmul.f32 %v701, %v704
    %v706 = vsub.f32 1.0, %v705
    %v707 = vmul.f32 %v704, %v706
    %v708 = vadd.f32 %v704, %v707
    %vm709 = vweird.f32 %v701
    %vm710 = vweird.f32 %v704
    %vm711 = vmor %vm709, %vm710
    %v712 = vsel %vm711, %v704, %v708
    %v713 = vand.u32 2147483647, %v701
    %vm714 = vcmp.eq.f32.partialorder %v713, 8.507059e+37
    %v715 = vand.u32 %v701, 2147483648
    %v716 = vor.u32 1.1754944e-38, %v715
    %v717 = vsel %vm714, %v716, %v712
    %v718 = vmul.f32 1.0, %v717
    %v719 = vrcp.pop %v702
    %v720 = vmul.f32 %v702, %v719
    %v721 = vsub.f32 1.0, %v720
    %v722 = vmul.f32 %v719, %v721
    %v723 = vadd.f32 %v719, %v722
    %vm724 = vweird.f32 %v702
    %vm725 = vweird.f32 %v719
    %vm726 = vmor %vm724, %vm725
    %v727 = vsel %vm726, %v719, %v723
    %v728 = vand.u32 2147483647, %v702
    %vm729 = vcmp.eq.f32.partialorder %v728, 8.507059e+37
    %v730 = vand.u32 %v702, 2147483648
    %v731 = vor.u32 1.1754944e-38, %v730
    %v732 = vsel %vm729, %v731, %v727
    %v733 = vmul.f32 1.0, %v732
    %v734 = vrcp.pop %v703
    %v735 = vmul.f32 %v703, %v734
    %v736 = vsub.f32 1.0, %v735
    %v737 = vmul.f32 %v734, %v736
    %v738 = vadd.f32 %v734, %v737
    %vm739 = vweird.f32 %v703
    %vm740 = vweird.f32 %v734
    %vm741 = vmor %vm739, %vm740
    %v742 = vsel %vm741, %v734, %v738
    %v743 = vand.u32 2147483647, %v703
    %vm744 = vcmp.eq.f32.partialorder %v743, 8.507059e+37
    %v745 = vand.u32 %v703, 2147483648
    %v746 = vor.u32 1.1754944e-38, %v745
    %v747 = vsel %vm744, %v746, %v742
    %v748 = vmul.f32 1.0, %v747
    %v749 = vtanh.pop %v691
    %v750 = vmul.f32 %v733, %v430
    %v751 = vmul.f32 %v718, %v749
    %v752 = vadd.f32 %v750, %v751
    %v753 = vtanh.pop %v752
    %v754 = vmul.f32 %v748, %v753
    %v755 = vpack.c.bf16 %v754, %v754
    %s756 = scalar_lea.vmem [#allocation2], 4
    %757 = vst [vmem:[%s756] sm:$0xf] %v755
    %s758 = smul.u32 2, 4
    %s759 = smul.addr %s758, 4
    %s760 = scalar_lea.vmem [#allocation3], %s759
    %v761 = vld [vmem:[%s760] sm:$0xff]
    %v762 = vld [vmem:[%s760 + $0x8] sm:$0xff]
    %v763 = vunpack.c.l.bf16 %v761
    %v764 = vunpack.c.h.bf16 %v761
    %v765 = vunpack.c.l.bf16 %v762
    %v766 = vunpack.c.h.bf16 %v762
    %v767 = vld [vmem:[#allocation9] sm:$0xff]
    %v768 = vld [vmem:[#allocation9 + $0x8] sm:$0xff]
    %v769 = vld [vmem:[#allocation9 + $0x10] sm:$0xff]
    %v770 = vld [vmem:[#allocation9 + $0x18] sm:$0xff]
    %v771 = vld [vmem:[#allocation9 + $0x20] sm:$0xff]
    %v772 = vld [vmem:[#allocation9 + $0x28] sm:$0xff]
    %v773 = vld [vmem:[#allocation9 + $0x30] sm:$0xff]
    %v774 = vld [vmem:[#allocation9 + $0x38] sm:$0xff]
    %v775 = vld [vmem:[#allocation9 + $0x40] sm:$0xff]
    %v776 = vld [vmem:[#allocation9 + $0x48] sm:$0xff]
    %v777 = vld [vmem:[#allocation9 + $0x50] sm:$0xff]
    %v778 = vld [vmem:[#allocation9 + $0x58] sm:$0xff]
    %v779 = vld [vmem:[#allocation9 + $0x60] sm:$0xff]
    %v780 = vld [vmem:[#allocation9 + $0x68] sm:$0xff]
    %v781 = vld [vmem:[#allocation9 + $0x70] sm:$0xff]
    %v782 = vld [vmem:[#allocation9 + $0x78] sm:$0xff]
    %v783 = vld [vmem:[#allocation9 + $0x80] sm:$0xff]
    %v784 = vld [vmem:[#allocation9 + $0x88] sm:$0xff]
    %v785 = vld [vmem:[#allocation9 + $0x90] sm:$0xff]
    %v786 = vld [vmem:[#allocation9 + $0x98] sm:$0xff]
    %v787 = vld [vmem:[#allocation9 + $0xa0] sm:$0xff]
    %v788 = vld [vmem:[#allocation9 + $0xa8] sm:$0xff]
    %v789 = vld [vmem:[#allocation9 + $0xb0] sm:$0xff]
    %v790 = vld [vmem:[#allocation9 + $0xb8] sm:$0xff]
    %v791 = vld [vmem:[#allocation9 + $0xc0] sm:$0xff]
    %v792 = vld [vmem:[#allocation9 + $0xc8] sm:$0xff]
    %v793 = vld [vmem:[#allocation9 + $0xd0] sm:$0xff]
    %v794 = vld [vmem:[#allocation9 + $0xd8] sm:$0xff]
    %v795 = vld [vmem:[#allocation9 + $0xe0] sm:$0xff]
    %v796 = vld [vmem:[#allocation9 + $0xe8] sm:$0xff]
    %v797 = vld [vmem:[#allocation9 + $0xf0] sm:$0xff]
    %v798 = vld [vmem:[#allocation9 + $0xf8] sm:$0xff]
    %v831 = vunpack.c.l.b16 %v767
    %v832 = vunpack.c.h.b16 %v767
    %v833 = vunpack.c.l.b16 %v768
    %v834 = vunpack.c.h.b16 %v768
    %v835 = vunpack.c.l.b16 %v769
    %v836 = vunpack.c.h.b16 %v769
    %v837 = vunpack.c.l.b16 %v770
    %v838 = vunpack.c.h.b16 %v770
    %v839 = vunpack.c.l.b16 %v771
    %v840 = vunpack.c.h.b16 %v771
    %v841 = vunpack.c.l.b16 %v772
    %v842 = vunpack.c.h.b16 %v772
    %v843 = vunpack.c.l.b16 %v773
    %v844 = vunpack.c.h.b16 %v773
    %v845 = vunpack.c.l.b16 %v774
    %v846 = vunpack.c.h.b16 %v774
    %v847 = vunpack.c.l.b16 %v775
    %v848 = vunpack.c.h.b16 %v775
    %v849 = vunpack.c.l.b16 %v776
    %v850 = vunpack.c.h.b16 %v776
    %v851 = vunpack.c.l.b16 %v777
    %v852 = vunpack.c.h.b16 %v777
    %v853 = vunpack.c.l.b16 %v778
    %v854 = vunpack.c.h.b16 %v778
    %v855 = vunpack.c.l.b16 %v779
    %v856 = vunpack.c.h.b16 %v779
    %v857 = vunpack.c.l.b16 %v780
    %v858 = vunpack.c.h.b16 %v780
    %v859 = vunpack.c.l.b16 %v781
    %v860 = vunpack.c.h.b16 %v781
    %v861 = vunpack.c.l.b16 %v782
    %v862 = vunpack.c.h.b16 %v782
    %v863 = vunpack.c.l.b16 %v783
    %v864 = vunpack.c.h.b16 %v783
    %v865 = vunpack.c.l.b16 %v784
    %v866 = vunpack.c.h.b16 %v784
    %v867 = vunpack.c.l.b16 %v785
    %v868 = vunpack.c.h.b16 %v785
    %v869 = vunpack.c.l.b16 %v786
    %v870 = vunpack.c.h.b16 %v786
    %v871 = vunpack.c.l.b16 %v787
    %v872 = vunpack.c.h.b16 %v787
    %v873 = vunpack.c.l.b16 %v788
    %v874 = vunpack.c.h.b16 %v788
    %v875 = vunpack.c.l.b16 %v789
    %v876 = vunpack.c.h.b16 %v789
    %v877 = vunpack.c.l.b16 %v790
    %v878 = vunpack.c.h.b16 %v790
    %v879 = vunpack.c.l.b16 %v791
    %v880 = vunpack.c.h.b16 %v791
    %v881 = vunpack.c.l.b16 %v792
    %v882 = vunpack.c.h.b16 %v792
    %v883 = vunpack.c.l.b16 %v793
    %v884 = vunpack.c.h.b16 %v793
    %v885 = vunpack.c.l.b16 %v794
    %v886 = vunpack.c.h.b16 %v794
    %v887 = vunpack.c.l.b16 %v795
    %v888 = vunpack.c.h.b16 %v795
    %v889 = vunpack.c.l.b16 %v796
    %v890 = vunpack.c.h.b16 %v796
    %v891 = vunpack.c.l.b16 %v797
    %v892 = vunpack.c.h.b16 %v797
    %v893 = vunpack.c.l.b16 %v798
    %v894 = vunpack.c.h.b16 %v798
    %v895 = vpack.c.b16 %v835, %v831
    %v896 = vpack.c.b16 %v836, %v832
    %v897 = vpack.c.b16 %v837, %v833
    %v898 = vpack.c.b16 %v838, %v834
    %v899 = vpack.c.b16 %v843, %v839
    %v900 = vpack.c.b16 %v844, %v840
    %v901 = vpack.c.b16 %v845, %v841
    %v902 = vpack.c.b16 %v846, %v842
    %v903 = vpack.c.b16 %v851, %v847
    %v904 = vpack.c.b16 %v852, %v848
    %v905 = vpack.c.b16 %v853, %v849
    %v906 = vpack.c.b16 %v854, %v850
    %v907 = vpack.c.b16 %v859, %v855
    %v908 = vpack.c.b16 %v860, %v856
    %v909 = vpack.c.b16 %v861, %v857
    %v910 = vpack.c.b16 %v862, %v858
    %v911 = vpack.c.b16 %v867, %v863
    %v912 = vpack.c.b16 %v868, %v864
    %v913 = vpack.c.b16 %v869, %v865
    %v914 = vpack.c.b16 %v870, %v866
    %v915 = vpack.c.b16 %v875, %v871
    %v916 = vpack.c.b16 %v876, %v872
    %v917 = vpack.c.b16 %v877, %v873
    %v918 = vpack.c.b16 %v878, %v874
    %v919 = vpack.c.b16 %v883, %v879
    %v920 = vpack.c.b16 %v884, %v880
    %v921 = vpack.c.b16 %v885, %v881
    %v922 = vpack.c.b16 %v886, %v882
    %v923 = vpack.c.b16 %v891, %v887
    %v924 = vpack.c.b16 %v892, %v888
    %v925 = vpack.c.b16 %v893, %v889
    %v926 = vpack.c.b16 %v894, %v890
    %959 = vmatpush.bf16.msra.mxu0 %v923
    %960 = vmatpush.bf16.msra.mxu0 %v919
    %961 = vmatpush.bf16.msra.mxu0 %v915
    %962 = vmatpush.bf16.msra.mxu0 %v911
    %963 = vmatpush.bf16.msra.mxu0 %v907
    %964 = vmatpush.bf16.msra.mxu0 %v903
    %965 = vmatpush.bf16.msra.mxu0 %v899
    %966 = vmatpush.bf16.msra.mxu0 %v895
    %967 = vmatmul.bf16.gmra.mxu0 %v755
    %v968 = vpop.f32.mrf.mxu0
    %v969 = vadd.f32 0.0, %v968
    %v970 = vpop.f32.mrf.mxu0
    %971 = vdwg.mxu0
    %972 = vmatpush.bf16.msra.mxu0 %v924
    %973 = vmatpush.bf16.msra.mxu0 %v920
    %974 = vmatpush.bf16.msra.mxu0 %v916
    %975 = vmatpush.bf16.msra.mxu0 %v912
    %976 = vmatpush.bf16.msra.mxu0 %v908
    %977 = vmatpush.bf16.msra.mxu0 %v904
    %978 = vmatpush.bf16.msra.mxu0 %v900
    %979 = vmatpush.bf16.msra.mxu0 %v896
    %980 = vmatmul.bf16.gmra.mxu0 %v755
    %v981 = vpop.f32.mrf.mxu0
    %v982 = vadd.f32 0.0, %v981
    %v983 = vpop.f32.mrf.mxu0
    %984 = vdwg.mxu0
    %985 = vmatpush.bf16.msra.mxu0 %v925
    %986 = vmatpush.bf16.msra.mxu0 %v921
    %987 = vmatpush.bf16.msra.mxu0 %v917
    %988 = vmatpush.bf16.msra.mxu0 %v913
    %989 = vmatpush.bf16.msra.mxu0 %v909
    %990 = vmatpush.bf16.msra.mxu0 %v905
    %991 = vmatpush.bf16.msra.mxu0 %v901
    %992 = vmatpush.bf16.msra.mxu0 %v897
    %993 = vmatmul.bf16.gmra.mxu0 %v755
    %v994 = vpop.f32.mrf.mxu0
    %v995 = vadd.f32 0.0, %v994
    %v996 = vpop.f32.mrf.mxu0
    %997 = vdwg.mxu0
    %998 = vmatpush.bf16.msra.mxu0 %v926
    %999 = vmatpush.bf16.msra.mxu0 %v922
    %1000 = vmatpush.bf16.msra.mxu0 %v918
    %1001 = vmatpush.bf16.msra.mxu0 %v914
    %1002 = vmatpush.bf16.msra.mxu0 %v910
    %1003 = vmatpush.bf16.msra.mxu0 %v906
    %1004 = vmatpush.bf16.msra.mxu0 %v902
    %1005 = vmatpush.bf16.msra.mxu0 %v898
    %1006 = vmatmul.bf16.gmra.mxu0 %v755
    %v1007 = vpop.f32.mrf.mxu0
    %v1008 = vadd.f32 0.0, %v1007
    %v1009 = vpop.f32.mrf.mxu0
    %1010 = vdwg.mxu0
    %v1011 = vadd.f32 %v763, %v969
    %v1012 = vadd.f32 %v764, %v982
    %v1013 = vadd.f32 %v765, %v995
    %v1014 = vadd.f32 %v766, %v1008
    %v1015 = vxor.u32 %v1011, 2147483648
    %v1016 = vxor.u32 %v1012, 2147483648
    %v1017 = vxor.u32 %v1013, 2147483648
    %v1018 = vmul.f32 %v1015, 1.442695
    %v1019 = vpow.pop %v1018
    %v1020 = vmul.f32 %v1016, 1.442695
    %v1021 = vpow.pop %v1020
    %v1022 = vmul.f32 %v1017, 1.442695
    %v1023 = vpow.pop %v1022
    %v1024 = vadd.f32 %v1019, 1.0
    %v1025 = vadd.f32 %v1021, 1.0
    %v1026 = vadd.f32 %v1023, 1.0
    %v1027 = vrcp.pop %v1024
    %v1028 = vmul.f32 %v1024, %v1027
    %v1029 = vsub.f32 1.0, %v1028
    %v1030 = vmul.f32 %v1027, %v1029
    %v1031 = vadd.f32 %v1027, %v1030
    %vm1032 = vweird.f32 %v1024
    %vm1033 = vweird.f32 %v1027
    %vm1034 = vmor %vm1032, %vm1033
    %v1035 = vsel %vm1034, %v1027, %v1031
    %v1036 = vand.u32 2147483647, %v1024
    %vm1037 = vcmp.eq.f32.partialorder %v1036, 8.507059e+37
    %v1038 = vand.u32 %v1024, 2147483648
    %v1039 = vor.u32 1.1754944e-38, %v1038
    %v1040 = vsel %vm1037, %v1039, %v1035
    %v1041 = vmul.f32 1.0, %v1040
    %v1042 = vrcp.pop %v1025
    %v1043 = vmul.f32 %v1025, %v1042
    %v1044 = vsub.f32 1.0, %v1043
    %v1045 = vmul.f32 %v1042, %v1044
    %v1046 = vadd.f32 %v1042, %v1045
    %vm1047 = vweird.f32 %v1025
    %vm1048 = vweird.f32 %v1042
    %vm1049 = vmor %vm1047, %vm1048
    %v1050 = vsel %vm1049, %v1042, %v1046
    %v1051 = vand.u32 2147483647, %v1025
    %vm1052 = vcmp.eq.f32.partialorder %v1051, 8.507059e+37
    %v1053 = vand.u32 %v1025, 2147483648
    %v1054 = vor.u32 1.1754944e-38, %v1053
    %v1055 = vsel %vm1052, %v1054, %v1050
    %v1056 = vmul.f32 1.0, %v1055
    %v1057 = vrcp.pop %v1026
    %v1058 = vmul.f32 %v1026, %v1057
    %v1059 = vsub.f32 1.0, %v1058
    %v1060 = vmul.f32 %v1057, %v1059
    %v1061 = vadd.f32 %v1057, %v1060
    %vm1062 = vweird.f32 %v1026
    %vm1063 = vweird.f32 %v1057
    %vm1064 = vmor %vm1062, %vm1063
    %v1065 = vsel %vm1064, %v1057, %v1061
    %v1066 = vand.u32 2147483647, %v1026
    %vm1067 = vcmp.eq.f32.partialorder %v1066, 8.507059e+37
    %v1068 = vand.u32 %v1026, 2147483648
    %v1069 = vor.u32 1.1754944e-38, %v1068
    %v1070 = vsel %vm1067, %v1069, %v1065
    %v1071 = vmul.f32 1.0, %v1070
    %v1072 = vtanh.pop %v1014
    %v1073 = vmul.f32 %v1056, %v752
    %v1074 = vmul.f32 %v1041, %v1072
    %v1075 = vadd.f32 %v1073, %v1074
    %v1076 = vtanh.pop %v1075
    %v1077 = vmul.f32 %v1071, %v1076
    %v1078 = vpack.c.bf16 %v1077, %v1077
    %s1079 = scalar_lea.vmem [#allocation2], 8
    %1080 = vst [vmem:[%s1079] sm:$0xf] %v1078
    %s1081 = smul.u32 3, 4
    %s1082 = smul.addr %s1081, 4
    %s1083 = scalar_lea.vmem [#allocation3], %s1082
    %v1084 = vld [vmem:[%s1083] sm:$0xff]
    %v1085 = vld [vmem:[%s1083 + $0x8] sm:$0xff]
    %v1086 = vunpack.c.l.bf16 %v1084
    %v1087 = vunpack.c.h.bf16 %v1084
    %v1088 = vunpack.c.l.bf16 %v1085
    %v1089 = vunpack.c.h.bf16 %v1085
    %v1090 = vld [vmem:[#allocation9] sm:$0xff]
    %v1091 = vld [vmem:[#allocation9 + $0x8] sm:$0xff]
    %v1092 = vld [vmem:[#allocation9 + $0x10] sm:$0xff]
    %v1093 = vld [vmem:[#allocation9 + $0x18] sm:$0xff]
    %v1094 = vld [vmem:[#allocation9 + $0x20] sm:$0xff]
    %v1095 = vld [vmem:[#allocation9 + $0x28] sm:$0xff]
    %v1096 = vld [vmem:[#allocation9 + $0x30] sm:$0xff]
    %v1097 = vld [vmem:[#allocation9 + $0x38] sm:$0xff]
    %v1098 = vld [vmem:[#allocation9 + $0x40] sm:$0xff]
    %v1099 = vld [vmem:[#allocation9 + $0x48] sm:$0xff]
    %v1100 = vld [vmem:[#allocation9 + $0x50] sm:$0xff]
    %v1101 = vld [vmem:[#allocation9 + $0x58] sm:$0xff]
    %v1102 = vld [vmem:[#allocation9 + $0x60] sm:$0xff]
    %v1103 = vld [vmem:[#allocation9 + $0x68] sm:$0xff]
    %v1104 = vld [vmem:[#allocation9 + $0x70] sm:$0xff]
    %v1105 = vld [vmem:[#allocation9 + $0x78] sm:$0xff]
    %v1106 = vld [vmem:[#allocation9 + $0x80] sm:$0xff]
    %v1107 = vld [vmem:[#allocation9 + $0x88] sm:$0xff]
    %v1108 = vld [vmem:[#allocation9 + $0x90] sm:$0xff]
    %v1109 = vld [vmem:[#allocation9 + $0x98] sm:$0xff]
    %v1110 = vld [vmem:[#allocation9 + $0xa0] sm:$0xff]
    %v1111 = vld [vmem:[#allocation9 + $0xa8] sm:$0xff]
    %v1112 = vld [vmem:[#allocation9 + $0xb0] sm:$0xff]
    %v1113 = vld [vmem:[#allocation9 + $0xb8] sm:$0xff]
    %v1114 = vld [vmem:[#allocation9 + $0xc0] sm:$0xff]
    %v1115 = vld [vmem:[#allocation9 + $0xc8] sm:$0xff]
    %v1116 = vld [vmem:[#allocation9 + $0xd0] sm:$0xff]
    %v1117 = vld [vmem:[#allocation9 + $0xd8] sm:$0xff]
    %v1118 = vld [vmem:[#allocation9 + $0xe0] sm:$0xff]
    %v1119 = vld [vmem:[#allocation9 + $0xe8] sm:$0xff]
    %v1120 = vld [vmem:[#allocation9 + $0xf0] sm:$0xff]
    %v1121 = vld [vmem:[#allocation9 + $0xf8] sm:$0xff]
    %v1154 = vunpack.c.l.b16 %v1090
    %v1155 = vunpack.c.h.b16 %v1090
    %v1156 = vunpack.c.l.b16 %v1091
    %v1157 = vunpack.c.h.b16 %v1091
    %v1158 = vunpack.c.l.b16 %v1092
    %v1159 = vunpack.c.h.b16 %v1092
    %v1160 = vunpack.c.l.b16 %v1093
    %v1161 = vunpack.c.h.b16 %v1093
    %v1162 = vunpack.c.l.b16 %v1094
    %v1163 = vunpack.c.h.b16 %v1094
    %v1164 = vunpack.c.l.b16 %v1095
    %v1165 = vunpack.c.h.b16 %v1095
    %v1166 = vunpack.c.l.b16 %v1096
    %v1167 = vunpack.c.h.b16 %v1096
    %v1168 = vunpack.c.l.b16 %v1097
    %v1169 = vunpack.c.h.b16 %v1097
    %v1170 = vunpack.c.l.b16 %v1098
    %v1171 = vunpack.c.h.b16 %v1098
    %v1172 = vunpack.c.l.b16 %v1099
    %v1173 = vunpack.c.h.b16 %v1099
    %v1174 = vunpack.c.l.b16 %v1100
    %v1175 = vunpack.c.h.b16 %v1100
    %v1176 = vunpack.c.l.b16 %v1101
    %v1177 = vunpack.c.h.b16 %v1101
    %v1178 = vunpack.c.l.b16 %v1102
    %v1179 = vunpack.c.h.b16 %v1102
    %v1180 = vunpack.c.l.b16 %v1103
    %v1181 = vunpack.c.h.b16 %v1103
    %v1182 = vunpack.c.l.b16 %v1104
    %v1183 = vunpack.c.h.b16 %v1104
    %v1184 = vunpack.c.l.b16 %v1105
    %v1185 = vunpack.c.h.b16 %v1105
    %v1186 = vunpack.c.l.b16 %v1106
    %v1187 = vunpack.c.h.b16 %v1106
    %v1188 = vunpack.c.l.b16 %v1107
    %v1189 = vunpack.c.h.b16 %v1107
    %v1190 = vunpack.c.l.b16 %v1108
    %v1191 = vunpack.c.h.b16 %v1108
    %v1192 = vunpack.c.l.b16 %v1109
    %v1193 = vunpack.c.h.b16 %v1109
    %v1194 = vunpack.c.l.b16 %v1110
    %v1195 = vunpack.c.h.b16 %v1110
    %v1196 = vunpack.c.l.b16 %v1111
    %v1197 = vunpack.c.h.b16 %v1111
    %v1198 = vunpack.c.l.b16 %v1112
    %v1199 = vunpack.c.h.b16 %v1112
    %v1200 = vunpack.c.l.b16 %v1113
    %v1201 = vunpack.c.h.b16 %v1113
    %v1202 = vunpack.c.l.b16 %v1114
    %v1203 = vunpack.c.h.b16 %v1114
    %v1204 = vunpack.c.l.b16 %v1115
    %v1205 = vunpack.c.h.b16 %v1115
    %v1206 = vunpack.c.l.b16 %v1116
    %v1207 = vunpack.c.h.b16 %v1116
    %v1208 = vunpack.c.l.b16 %v1117
    %v1209 = vunpack.c.h.b16 %v1117
    %v1210 = vunpack.c.l.b16 %v1118
    %v1211 = vunpack.c.h.b16 %v1118
    %v1212 = vunpack.c.l.b16 %v1119
    %v1213 = vunpack.c.h.b16 %v1119
    %v1214 = vunpack.c.l.b16 %v1120
    %v1215 = vunpack.c.h.b16 %v1120
    %v1216 = vunpack.c.l.b16 %v1121
    %v1217 = vunpack.c.h.b16 %v1121
    %v1218 = vpack.c.b16 %v1158, %v1154
    %v1219 = vpack.c.b16 %v1159, %v1155
    %v1220 = vpack.c.b16 %v1160, %v1156
    %v1221 = vpack.c.b16 %v1161, %v1157
    %v1222 = vpack.c.b16 %v1166, %v1162
    %v1223 = vpack.c.b16 %v1167, %v1163
    %v1224 = vpack.c.b16 %v1168, %v1164
    %v1225 = vpack.c.b16 %v1169, %v1165
    %v1226 = vpack.c.b16 %v1174, %v1170
    %v1227 = vpack.c.b16 %v1175, %v1171
    %v1228 = vpack.c.b16 %v1176, %v1172
    %v1229 = vpack.c.b16 %v1177, %v1173
    %v1230 = vpack.c.b16 %v1182, %v1178
    %v1231 = vpack.c.b16 %v1183, %v1179
    %v1232 = vpack.c.b16 %v1184, %v1180
    %v1233 = vpack.c.b16 %v1185, %v1181
    %v1234 = vpack.c.b16 %v1190, %v1186
    %v1235 = vpack.c.b16 %v1191, %v1187
    %v1236 = vpack.c.b16 %v1192, %v1188
    %v1237 = vpack.c.b16 %v1193, %v1189
    %v1238 = vpack.c.b16 %v1198, %v1194
    %v1239 = vpack.c.b16 %v1199, %v1195
    %v1240 = vpack.c.b16 %v1200, %v1196
    %v1241 = vpack.c.b16 %v1201, %v1197
    %v1242 = vpack.c.b16 %v1206, %v1202
    %v1243 = vpack.c.b16 %v1207, %v1203
    %v1244 = vpack.c.b16 %v1208, %v1204
    %v1245 = vpack.c.b16 %v1209, %v1205
    %v1246 = vpack.c.b16 %v1214, %v1210
    %v1247 = vpack.c.b16 %v1215, %v1211
    %v1248 = vpack.c.b16 %v1216, %v1212
    %v1249 = vpack.c.b16 %v1217, %v1213
    %1282 = vmatpush.bf16.msra.mxu0 %v1246
    %1283 = vmatpush.bf16.msra.mxu0 %v1242
    %1284 = vmatpush.bf16.msra.mxu0 %v1238
    %1285 = vmatpush.bf16.msra.mxu0 %v1234
    %1286 = vmatpush.bf16.msra.mxu0 %v1230
    %1287 = vmatpush.bf16.msra.mxu0 %v1226
    %1288 = vmatpush.bf16.msra.mxu0 %v1222
    %1289 = vmatpush.bf16.msra.mxu0 %v1218
    %1290 = vmatmul.bf16.gmra.mxu0 %v1078
    %v1291 = vpop.f32.mrf.mxu0
    %v1292 = vadd.f32 0.0, %v1291
    %v1293 = vpop.f32.mrf.mxu0
    %1294 = vdwg.mxu0
    %1295 = vmatpush.bf16.msra.mxu0 %v1247
    %1296 = vmatpush.bf16.msra.mxu0 %v1243
    %1297 = vmatpush.bf16.msra.mxu0 %v1239
    %1298 = vmatpush.bf16.msra.mxu0 %v1235
    %1299 = vmatpush.bf16.msra.mxu0 %v1231
    %1300 = vmatpush.bf16.msra.mxu0 %v1227
    %1301 = vmatpush.bf16.msra.mxu0 %v1223
    %1302 = vmatpush.bf16.msra.mxu0 %v1219
    %1303 = vmatmul.bf16.gmra.mxu0 %v1078
    %v1304 = vpop.f32.mrf.mxu0
    %v1305 = vadd.f32 0.0, %v1304
    %v1306 = vpop.f32.mrf.mxu0
    %1307 = vdwg.mxu0
    %1308 = vmatpush.bf16.msra.mxu0 %v1248
    %1309 = vmatpush.bf16.msra.mxu0 %v1244
    %1310 = vmatpush.bf16.msra.mxu0 %v1240
    %1311 = vmatpush.bf16.msra.mxu0 %v1236
    %1312 = vmatpush.bf16.msra.mxu0 %v1232
    %1313 = vmatpush.bf16.msra.mxu0 %v1228
    %1314 = vmatpush.bf16.msra.mxu0 %v1224
    %1315 = vmatpush.bf16.msra.mxu0 %v1220
    %1316 = vmatmul.bf16.gmra.mxu0 %v1078
    %v1317 = vpop.f32.mrf.mxu0
    %v1318 = vadd.f32 0.0, %v1317
    %v1319 = vpop.f32.mrf.mxu0
    %1320 = vdwg.mxu0
    %1321 = vmatpush.bf16.msra.mxu0 %v1249
    %1322 = vmatpush.bf16.msra.mxu0 %v1245
    %1323 = vmatpush.bf16.msra.mxu0 %v1241
    %1324 = vmatpush.bf16.msra.mxu0 %v1237
    %1325 = vmatpush.bf16.msra.mxu0 %v1233
    %1326 = vmatpush.bf16.msra.mxu0 %v1229
    %1327 = vmatpush.bf16.msra.mxu0 %v1225
    %1328 = vmatpush.bf16.msra.mxu0 %v1221
    %1329 = vmatmul.bf16.gmra.mxu0 %v1078
    %v1330 = vpop.f32.mrf.mxu0
    %v1331 = vadd.f32 0.0, %v1330
    %v1332 = vpop.f32.mrf.mxu0
    %1333 = vdwg.mxu0
    %v1334 = vadd.f32 %v1086, %v1292
    %v1335 = vadd.f32 %v1087, %v1305
    %v1336 = vadd.f32 %v1088, %v1318
    %v1337 = vadd.f32 %v1089, %v1331
    %v1338 = vxor.u32 %v1334, 2147483648
    %v1339 = vxor.u32 %v1335, 2147483648
    %v1340 = vxor.u32 %v1336, 2147483648
    %v1341 = vmul.f32 %v1338, 1.442695
    %v1342 = vpow.pop %v1341
    %v1343 = vmul.f32 %v1339, 1.442695
    %v1344 = vpow.pop %v1343
    %v1345 = vmul.f32 %v1340, 1.442695
    %v1346 = vpow.pop %v1345
    %v1347 = vadd.f32 %v1342, 1.0
    %v1348 = vadd.f32 %v1344, 1.0
    %v1349 = vadd.f32 %v1346, 1.0
    %v1350 = vrcp.pop %v1347
    %v1351 = vmul.f32 %v1347, %v1350
    %v1352 = vsub.f32 1.0, %v1351
    %v1353 = vmul.f32 %v1350, %v1352
    %v1354 = vadd.f32 %v1350, %v1353
    %vm1355 = vweird.f32 %v1347
    %vm1356 = vweird.f32 %v1350
    %vm1357 = vmor %vm1355, %vm1356
    %v1358 = vsel %vm1357, %v1350, %v1354
    %v1359 = vand.u32 2147483647, %v1347
    %vm1360 = vcmp.eq.f32.partialorder %v1359, 8.507059e+37
    %v1361 = vand.u32 %v1347, 2147483648
    %v1362 = vor.u32 1.1754944e-38, %v1361
    %v1363 = vsel %vm1360, %v1362, %v1358
    %v1364 = vmul.f32 1.0, %v1363
    %v1365 = vrcp.pop %v1348
    %v1366 = vmul.f32 %v1348, %v1365
    %v1367 = vsub.f32 1.0, %v1366
    %v1368 = vmul.f32 %v1365, %v1367
    %v1369 = vadd.f32 %v1365, %v1368
    %vm1370 = vweird.f32 %v1348
    %vm1371 = vweird.f32 %v1365
    %vm1372 = vmor %vm1370, %vm1371
    %v1373 = vsel %vm1372, %v1365, %v1369
    %v1374 = vand.u32 2147483647, %v1348
    %vm1375 = vcmp.eq.f32.partialorder %v1374, 8.507059e+37
    %v1376 = vand.u32 %v1348, 2147483648
    %v1377 = vor.u32 1.1754944e-38, %v1376
    %v1378 = vsel %vm1375, %v1377, %v1373
    %v1379 = vmul.f32 1.0, %v1378
    %v1380 = vrcp.pop %v1349
    %v1381 = vmul.f32 %v1349, %v1380
    %v1382 = vsub.f32 1.0, %v1381
    %v1383 = vmul.f32 %v1380, %v1382
    %v1384 = vadd.f32 %v1380, %v1383
    %vm1385 = vweird.f32 %v1349
    %vm1386 = vweird.f32 %v1380
    %vm1387 = vmor %vm1385, %vm1386
    %v1388 = vsel %vm1387, %v1380, %v1384
    %v1389 = vand.u32 2147483647, %v1349
    %vm1390 = vcmp.eq.f32.partialorder %v1389, 8.507059e+37
    %v1391 = vand.u32 %v1349, 2147483648
    %v1392 = vor.u32 1.1754944e-38, %v1391
    %v1393 = vsel %vm1390, %v1392, %v1388
    %v1394 = vmul.f32 1.0, %v1393
    %v1395 = vtanh.pop %v1337
    %v1396 = vmul.f32 %v1379, %v1075
    %v1397 = vmul.f32 %v1364, %v1395
    %v1398 = vadd.f32 %v1396, %v1397
    %v1399 = vtanh.pop %v1398
    %v1400 = vmul.f32 %v1394, %v1399
    %v1401 = vpack.c.bf16 %v1400, %v1400
    %s1402 = scalar_lea.vmem [#allocation2], 12
    %1403 = vst [vmem:[%s1402] sm:$0xf] %v1401
    %s1404 = smul.u32 4, 4
    %s1405 = smul.addr %s1404, 4
    %s1406 = scalar_lea.vmem [#allocation3], %s1405
    %v1407 = vld [vmem:[%s1406] sm:$0xff]
    %v1408 = vld [vmem:[%s1406 + $0x8] sm:$0xff]
    %v1409 = vunpack.c.l.bf16 %v1407
    %v1410 = vunpack.c.h.bf16 %v1407
    %v1411 = vunpack.c.l.bf16 %v1408
    %v1412 = vunpack.c.h.bf16 %v1408
    %v1413 = vld [vmem:[#allocation9] sm:$0xff]
    %v1414 = vld [vmem:[#allocation9 + $0x8] sm:$0xff]
    %v1415 = vld [vmem:[#allocation9 + $0x10] sm:$0xff]
    %v1416 = vld [vmem:[#allocation9 + $0x18] sm:$0xff]
    %v1417 = vld [vmem:[#allocation9 + $0x20] sm:$0xff]
    %v1418 = vld [vmem:[#allocation9 + $0x28] sm:$0xff]
    %v1419 = vld [vmem:[#allocation9 + $0x30] sm:$0xff]
    %v1420 = vld [vmem:[#allocation9 + $0x38] sm:$0xff]
    %v1421 = vld [vmem:[#allocation9 + $0x40] sm:$0xff]
    %v1422 = vld [vmem:[#allocation9 + $0x48] sm:$0xff]
    %v1423 = vld [vmem:[#allocation9 + $0x50] sm:$0xff]
    %v1424 = vld [vmem:[#allocation9 + $0x58] sm:$0xff]
    %v1425 = vld [vmem:[#allocation9 + $0x60] sm:$0xff]
    %v1426 = vld [vmem:[#allocation9 + $0x68] sm:$0xff]
    %v1427 = vld [vmem:[#allocation9 + $0x70] sm:$0xff]
    %v1428 = vld [vmem:[#allocation9 + $0x78] sm:$0xff]
    %v1429 = vld [vmem:[#allocation9 + $0x80] sm:$0xff]
    %v1430 = vld [vmem:[#allocation9 + $0x88] sm:$0xff]
    %v1431 = vld [vmem:[#allocation9 + $0x90] sm:$0xff]
    %v1432 = vld [vmem:[#allocation9 + $0x98] sm:$0xff]
    %v1433 = vld [vmem:[#allocation9 + $0xa0] sm:$0xff]
    %v1434 = vld [vmem:[#allocation9 + $0xa8] sm:$0xff]
    %v1435 = vld [vmem:[#allocation9 + $0xb0] sm:$0xff]
    %v1436 = vld [vmem:[#allocation9 + $0xb8] sm:$0xff]
    %v1437 = vld [vmem:[#allocation9 + $0xc0] sm:$0xff]
    %v1438 = vld [vmem:[#allocation9 + $0xc8] sm:$0xff]
    %v1439 = vld [vmem:[#allocation9 + $0xd0] sm:$0xff]
    %v1440 = vld [vmem:[#allocation9 + $0xd8] sm:$0xff]
    %v1441 = vld [vmem:[#allocation9 + $0xe0] sm:$0xff]
    %v1442 = vld [vmem:[#allocation9 + $0xe8] sm:$0xff]
    %v1443 = vld [vmem:[#allocation9 + $0xf0] sm:$0xff]
    %v1444 = vld [vmem:[#allocation9 + $0xf8] sm:$0xff]
    %v1477 = vunpack.c.l.b16 %v1413
    %v1478 = vunpack.c.h.b16 %v1413
    %v1479 = vunpack.c.l.b16 %v1414
    %v1480 = vunpack.c.h.b16 %v1414
    %v1481 = vunpack.c.l.b16 %v1415
    %v1482 = vunpack.c.h.b16 %v1415
    %v1483 = vunpack.c.l.b16 %v1416
    %v1484 = vunpack.c.h.b16 %v1416
    %v1485 = vunpack.c.l.b16 %v1417
    %v1486 = vunpack.c.h.b16 %v1417
    %v1487 = vunpack.c.l.b16 %v1418
    %v1488 = vunpack.c.h.b16 %v1418
    %v1489 = vunpack.c.l.b16 %v1419
    %v1490 = vunpack.c.h.b16 %v1419
    %v1491 = vunpack.c.l.b16 %v1420
    %v1492 = vunpack.c.h.b16 %v1420
    %v1493 = vunpack.c.l.b16 %v1421
    %v1494 = vunpack.c.h.b16 %v1421
    %v1495 = vunpack.c.l.b16 %v1422
    %v1496 = vunpack.c.h.b16 %v1422
    %v1497 = vunpack.c.l.b16 %v1423
    %v1498 = vunpack.c.h.b16 %v1423
    %v1499 = vunpack.c.l.b16 %v1424
    %v1500 = vunpack.c.h.b16 %v1424
    %v1501 = vunpack.c.l.b16 %v1425
    %v1502 = vunpack.c.h.b16 %v1425
    %v1503 = vunpack.c.l.b16 %v1426
    %v1504 = vunpack.c.h.b16 %v1426
    %v1505 = vunpack.c.l.b16 %v1427
    %v1506 = vunpack.c.h.b16 %v1427
    %v1507 = vunpack.c.l.b16 %v1428
    %v1508 = vunpack.c.h.b16 %v1428
    %v1509 = vunpack.c.l.b16 %v1429
    %v1510 = vunpack.c.h.b16 %v1429
    %v1511 = vunpack.c.l.b16 %v1430
    %v1512 = vunpack.c.h.b16 %v1430
    %v1513 = vunpack.c.l.b16 %v1431
    %v1514 = vunpack.c.h.b16 %v1431
    %v1515 = vunpack.c.l.b16 %v1432
    %v1516 = vunpack.c.h.b16 %v1432
    %v1517 = vunpack.c.l.b16 %v1433
    %v1518 = vunpack.c.h.b16 %v1433
    %v1519 = vunpack.c.l.b16 %v1434
    %v1520 = vunpack.c.h.b16 %v1434
    %v1521 = vunpack.c.l.b16 %v1435
    %v1522 = vunpack.c.h.b16 %v1435
    %v1523 = vunpack.c.l.b16 %v1436
    %v1524 = vunpack.c.h.b16 %v1436
    %v1525 = vunpack.c.l.b16 %v1437
    %v1526 = vunpack.c.h.b16 %v1437
    %v1527 = vunpack.c.l.b16 %v1438
    %v1528 = vunpack.c.h.b16 %v1438
    %v1529 = vunpack.c.l.b16 %v1439
    %v1530 = vunpack.c.h.b16 %v1439
    %v1531 = vunpack.c.l.b16 %v1440
    %v1532 = vunpack.c.h.b16 %v1440
    %v1533 = vunpack.c.l.b16 %v1441
    %v1534 = vunpack.c.h.b16 %v1441
    %v1535 = vunpack.c.l.b16 %v1442
    %v1536 = vunpack.c.h.b16 %v1442
    %v1537 = vunpack.c.l.b16 %v1443
    %v1538 = vunpack.c.h.b16 %v1443
    %v1539 = vunpack.c.l.b16 %v1444
    %v1540 = vunpack.c.h.b16 %v1444
    %v1541 = vpack.c.b16 %v1481, %v1477
    %v1542 = vpack.c.b16 %v1482, %v1478
    %v1543 = vpack.c.b16 %v1483, %v1479
    %v1544 = vpack.c.b16 %v1484, %v1480
    %v1545 = vpack.c.b16 %v1489, %v1485
    %v1546 = vpack.c.b16 %v1490, %v1486
    %v1547 = vpack.c.b16 %v1491, %v1487
    %v1548 = vpack.c.b16 %v1492, %v1488
    %v1549 = vpack.c.b16 %v1497, %v1493
    %v1550 = vpack.c.b16 %v1498, %v1494
    %v1551 = vpack.c.b16 %v1499, %v1495
    %v1552 = vpack.c.b16 %v1500, %v1496
    %v1553 = vpack.c.b16 %v1505, %v1501
    %v1554 = vpack.c.b16 %v1506, %v1502
    %v1555 = vpack.c.b16 %v1507, %v1503
    %v1556 = vpack.c.b16 %v1508, %v1504
    %v1557 = vpack.c.b16 %v1513, %v1509
    %v1558 = vpack.c.b16 %v1514, %v1510
    %v1559 = vpack.c.b16 %v1515, %v1511
    %v1560 = vpack.c.b16 %v1516, %v1512
    %v1561 = vpack.c.b16 %v1521, %v1517
    %v1562 = vpack.c.b16 %v1522, %v1518
    %v1563 = vpack.c.b16 %v1523, %v1519
    %v1564 = vpack.c.b16 %v1524, %v1520
    %v1565 = vpack.c.b16 %v1529, %v1525
    %v1566 = vpack.c.b16 %v1530, %v1526
    %v1567 = vpack.c.b16 %v1531, %v1527
    %v1568 = vpack.c.b16 %v1532, %v1528
    %v1569 = vpack.c.b16 %v1537, %v1533
    %v1570 = vpack.c.b16 %v1538, %v1534
    %v1571 = vpack.c.b16 %v1539, %v1535
    %v1572 = vpack.c.b16 %v1540, %v1536
    %1605 = vmatpush.bf16.msra.mxu0 %v1569
    %1606 = vmatpush.bf16.msra.mxu0 %v1565
    %1607 = vmatpush.bf16.msra.mxu0 %v1561
    %1608 = vmatpush.bf16.msra.mxu0 %v1557
    %1609 = vmatpush.bf16.msra.mxu0 %v1553
    %1610 = vmatpush.bf16.msra.mxu0 %v1549
    %1611 = vmatpush.bf16.msra.mxu0 %v1545
    %1612 = vmatpush.bf16.msra.mxu0 %v1541
    %1613 = vmatmul.bf16.gmra.mxu0 %v1401
    %v1614 = vpop.f32.mrf.mxu0
    %v1615 = vadd.f32 0.0, %v1614
    %v1616 = vpop.f32.mrf.mxu0
    %1617 = vdwg.mxu0
    %1618 = vmatpush.bf16.msra.mxu0 %v1570
    %1619 = vmatpush.bf16.msra.mxu0 %v1566
    %1620 = vmatpush.bf16.msra.mxu0 %v1562
    %1621 = vmatpush.bf16.msra.mxu0 %v1558
    %1622 = vmatpush.bf16.msra.mxu0 %v1554
    %1623 = vmatpush.bf16.msra.mxu0 %v1550
    %1624 = vmatpush.bf16.msra.mxu0 %v1546
    %1625 = vmatpush.bf16.msra.mxu0 %v1542
    %1626 = vmatmul.bf16.gmra.mxu0 %v1401
    %v1627 = vpop.f32.mrf.mxu0
    %v1628 = vadd.f32 0.0, %v1627
    %v1629 = vpop.f32.mrf.mxu0
    %1630 = vdwg.mxu0
    %1631 = vmatpush.bf16.msra.mxu0 %v1571
    %1632 = vmatpush.bf16.msra.mxu0 %v1567
    %1633 = vmatpush.bf16.msra.mxu0 %v1563
    %1634 = vmatpush.bf16.msra.mxu0 %v1559
    %1635 = vmatpush.bf16.msra.mxu0 %v1555
    %1636 = vmatpush.bf16.msra.mxu0 %v1551
    %1637 = vmatpush.bf16.msra.mxu0 %v1547
    %1638 = vmatpush.bf16.msra.mxu0 %v1543
    %1639 = vmatmul.bf16.gmra.mxu0 %v1401
    %v1640 = vpop.f32.mrf.mxu0
    %v1641 = vadd.f32 0.0, %v1640
    %v1642 = vpop.f32.mrf.mxu0
    %1643 = vdwg.mxu0
    %1644 = vmatpush.bf16.msra.mxu0 %v1572
    %1645 = vmatpush.bf16.msra.mxu0 %v1568
    %1646 = vmatpush.bf16.msra.mxu0 %v1564
    %1647 = vmatpush.bf16.msra.mxu0 %v1560
    %1648 = vmatpush.bf16.msra.mxu0 %v1556
    %1649 = vmatpush.bf16.msra.mxu0 %v1552
    %1650 = vmatpush.bf16.msra.mxu0 %v1548
    %1651 = vmatpush.bf16.msra.mxu0 %v1544
    %1652 = vmatmul.bf16.gmra.mxu0 %v1401
    %v1653 = vpop.f32.mrf.mxu0
    %v1654 = vadd.f32 0.0, %v1653
    %v1655 = vpop.f32.mrf.mxu0
    %1656 = vdwg.mxu0
    %v1657 = vadd.f32 %v1409, %v1615
    %v1658 = vadd.f32 %v1410, %v1628
    %v1659 = vadd.f32 %v1411, %v1641
    %v1660 = vadd.f32 %v1412, %v1654
    %v1661 = vxor.u32 %v1657, 2147483648
    %v1662 = vxor.u32 %v1658, 2147483648
    %v1663 = vxor.u32 %v1659, 2147483648
    %v1664 = vmul.f32 %v1661, 1.442695
    %v1665 = vpow.pop %v1664
    %v1666 = vmul.f32 %v1662, 1.442695
    %v1667 = vpow.pop %v1666
    %v1668 = vmul.f32 %v1663, 1.442695
    %v1669 = vpow.pop %v1668
    %v1670 = vadd.f32 %v1665, 1.0
    %v1671 = vadd.f32 %v1667, 1.0
    %v1672 = vadd.f32 %v1669, 1.0
    %v1673 = vrcp.pop %v1670
    %v1674 = vmul.f32 %v1670, %v1673
    %v1675 = vsub.f32 1.0, %v1674
    %v1676 = vmul.f32 %v1673, %v1675
    %v1677 = vadd.f32 %v1673, %v1676
    %vm1678 = vweird.f32 %v1670
    %vm1679 = vweird.f32 %v1673
    %vm1680 = vmor %vm1678, %vm1679
    %v1681 = vsel %vm1680, %v1673, %v1677
    %v1682 = vand.u32 2147483647, %v1670
    %vm1683 = vcmp.eq.f32.partialorder %v1682, 8.507059e+37
    %v1684 = vand.u32 %v1670, 2147483648
    %v1685 = vor.u32 1.1754944e-38, %v1684
    %v1686 = vsel %vm1683, %v1685, %v1681
    %v1687 = vmul.f32 1.0, %v1686
    %v1688 = vrcp.pop %v1671
    %v1689 = vmul.f32 %v1671, %v1688
    %v1690 = vsub.f32 1.0, %v1689
    %v1691 = vmul.f32 %v1688, %v1690
    %v1692 = vadd.f32 %v1688, %v1691
    %vm1693 = vweird.f32 %v1671
    %vm1694 = vweird.f32 %v1688
    %vm1695 = vmor %vm1693, %vm1694
    %v1696 = vsel %vm1695, %v1688, %v1692
    %v1697 = vand.u32 2147483647, %v1671
    %vm1698 = vcmp.eq.f32.partialorder %v1697, 8.507059e+37
    %v1699 = vand.u32 %v1671, 2147483648
    %v1700 = vor.u32 1.1754944e-38, %v1699
    %v1701 = vsel %vm1698, %v1700, %v1696
    %v1702 = vmul.f32 1.0, %v1701
    %v1703 = vrcp.pop %v1672
    %v1704 = vmul.f32 %v1672, %v1703
    %v1705 = vsub.f32 1.0, %v1704
    %v1706 = vmul.f32 %v1703, %v1705
    %v1707 = vadd.f32 %v1703, %v1706
    %vm1708 = vweird.f32 %v1672
    %vm1709 = vweird.f32 %v1703
    %vm1710 = vmor %vm1708, %vm1709
    %v1711 = vsel %vm1710, %v1703, %v1707
    %v1712 = vand.u32 2147483647, %v1672
    %vm1713 = vcmp.eq.f32.partialorder %v1712, 8.507059e+37
    %v1714 = vand.u32 %v1672, 2147483648
    %v1715 = vor.u32 1.1754944e-38, %v1714
    %v1716 = vsel %vm1713, %v1715, %v1711
    %v1717 = vmul.f32 1.0, %v1716
    %v1718 = vtanh.pop %v1660
    %v1719 = vmul.f32 %v1702, %v1398
    %v1720 = vmul.f32 %v1687, %v1718
    %v1721 = vadd.f32 %v1719, %v1720
    %v1722 = vtanh.pop %v1721
    %v1723 = vmul.f32 %v1717, %v1722
    %v1724 = vpack.c.bf16 %v1723, %v1723
    %s1725 = scalar_lea.vmem [#allocation2], 16
    %1726 = vst [vmem:[%s1725] sm:$0xf] %v1724
    %s1727 = smul.u32 5, 4
    %s1728 = smul.addr %s1727, 4
    %s1729 = scalar_lea.vmem [#allocation3], %s1728
    %v1730 = vld [vmem:[%s1729] sm:$0xff]
    %v1731 = vld [vmem:[%s1729 + $0x8] sm:$0xff]
    %v1732 = vunpack.c.l.bf16 %v1730
    %v1733 = vunpack.c.h.bf16 %v1730
    %v1734 = vunpack.c.l.bf16 %v1731
    %v1735 = vunpack.c.h.bf16 %v1731
    %v1736 = vld [vmem:[#allocation9] sm:$0xff]
    %v1737 = vld [vmem:[#allocation9 + $0x8] sm:$0xff]
    %v1738 = vld [vmem:[#allocation9 + $0x10] sm:$0xff]
    %v1739 = vld [vmem:[#allocation9 + $0x18] sm:$0xff]
    %v1740 = vld [vmem:[#allocation9 + $0x20] sm:$0xff]
    %v1741 = vld [vmem:[#allocation9 + $0x28] sm:$0xff]
    %v1742 = vld [vmem:[#allocation9 + $0x30] sm:$0xff]
    %v1743 = vld [vmem:[#allocation9 + $0x38] sm:$0xff]
    %v1744 = vld [vmem:[#allocation9 + $0x40] sm:$0xff]
    %v1745 = vld [vmem:[#allocation9 + $0x48] sm:$0xff]
    %v1746 = vld [vmem:[#allocation9 + $0x50] sm:$0xff]
    %v1747 = vld [vmem:[#allocation9 + $0x58] sm:$0xff]
    %v1748 = vld [vmem:[#allocation9 + $0x60] sm:$0xff]
    %v1749 = vld [vmem:[#allocation9 + $0x68] sm:$0xff]
    %v1750 = vld [vmem:[#allocation9 + $0x70] sm:$0xff]
    %v1751 = vld [vmem:[#allocation9 + $0x78] sm:$0xff]
    %v1752 = vld [vmem:[#allocation9 + $0x80] sm:$0xff]
    %v1753 = vld [vmem:[#allocation9 + $0x88] sm:$0xff]
    %v1754 = vld [vmem:[#allocation9 + $0x90] sm:$0xff]
    %v1755 = vld [vmem:[#allocation9 + $0x98] sm:$0xff]
    %v1756 = vld [vmem:[#allocation9 + $0xa0] sm:$0xff]
    %v1757 = vld [vmem:[#allocation9 + $0xa8] sm:$0xff]
    %v1758 = vld [vmem:[#allocation9 + $0xb0] sm:$0xff]
    %v1759 = vld [vmem:[#allocation9 + $0xb8] sm:$0xff]
    %v1760 = vld [vmem:[#allocation9 + $0xc0] sm:$0xff]
    %v1761 = vld [vmem:[#allocation9 + $0xc8] sm:$0xff]
    %v1762 = vld [vmem:[#allocation9 + $0xd0] sm:$0xff]
    %v1763 = vld [vmem:[#allocation9 + $0xd8] sm:$0xff]
    %v1764 = vld [vmem:[#allocation9 + $0xe0] sm:$0xff]
    %v1765 = vld [vmem:[#allocation9 + $0xe8] sm:$0xff]
    %v1766 = vld [vmem:[#allocation9 + $0xf0] sm:$0xff]
    %v1767 = vld [vmem:[#allocation9 + $0xf8] sm:$0xff]
    %v1800 = vunpack.c.l.b16 %v1736
    %v1801 = vunpack.c.h.b16 %v1736
    %v1802 = vunpack.c.l.b16 %v1737
    %v1803 = vunpack.c.h.b16 %v1737
    %v1804 = vunpack.c.l.b16 %v1738
    %v1805 = vunpack.c.h.b16 %v1738
    %v1806 = vunpack.c.l.b16 %v1739
    %v1807 = vunpack.c.h.b16 %v1739
    %v1808 = vunpack.c.l.b16 %v1740
    %v1809 = vunpack.c.h.b16 %v1740
    %v1810 = vunpack.c.l.b16 %v1741
    %v1811 = vunpack.c.h.b16 %v1741
    %v1812 = vunpack.c.l.b16 %v1742
    %v1813 = vunpack.c.h.b16 %v1742
    %v1814 = vunpack.c.l.b16 %v1743
    %v1815 = vunpack.c.h.b16 %v1743
    %v1816 = vunpack.c.l.b16 %v1744
    %v1817 = vunpack.c.h.b16 %v1744
    %v1818 = vunpack.c.l.b16 %v1745
    %v1819 = vunpack.c.h.b16 %v1745
    %v1820 = vunpack.c.l.b16 %v1746
    %v1821 = vunpack.c.h.b16 %v1746
    %v1822 = vunpack.c.l.b16 %v1747
    %v1823 = vunpack.c.h.b16 %v1747
    %v1824 = vunpack.c.l.b16 %v1748
    %v1825 = vunpack.c.h.b16 %v1748
    %v1826 = vunpack.c.l.b16 %v1749
    %v1827 = vunpack.c.h.b16 %v1749
    %v1828 = vunpack.c.l.b16 %v1750
    %v1829 = vunpack.c.h.b16 %v1750
    %v1830 = vunpack.c.l.b16 %v1751
    %v1831 = vunpack.c.h.b16 %v1751
    %v1832 = vunpack.c.l.b16 %v1752
    %v1833 = vunpack.c.h.b16 %v1752
    %v1834 = vunpack.c.l.b16 %v1753
    %v1835 = vunpack.c.h.b16 %v1753
    %v1836 = vunpack.c.l.b16 %v1754
    %v1837 = vunpack.c.h.b16 %v1754
    %v1838 = vunpack.c.l.b16 %v1755
    %v1839 = vunpack.c.h.b16 %v1755
    %v1840 = vunpack.c.l.b16 %v1756
    %v1841 = vunpack.c.h.b16 %v1756
    %v1842 = vunpack.c.l.b16 %v1757
    %v1843 = vunpack.c.h.b16 %v1757
    %v1844 = vunpack.c.l.b16 %v1758
    %v1845 = vunpack.c.h.b16 %v1758
    %v1846 = vunpack.c.l.b16 %v1759
    %v1847 = vunpack.c.h.b16 %v1759
    %v1848 = vunpack.c.l.b16 %v1760
    %v1849 = vunpack.c.h.b16 %v1760
    %v1850 = vunpack.c.l.b16 %v1761
    %v1851 = vunpack.c.h.b16 %v1761
    %v1852 = vunpack.c.l.b16 %v1762
    %v1853 = vunpack.c.h.b16 %v1762
    %v1854 = vunpack.c.l.b16 %v1763
    %v1855 = vunpack.c.h.b16 %v1763
    %v1856 = vunpack.c.l.b16 %v1764
    %v1857 = vunpack.c.h.b16 %v1764
    %v1858 = vunpack.c.l.b16 %v1765
    %v1859 = vunpack.c.h.b16 %v1765
    %v1860 = vunpack.c.l.b16 %v1766
    %v1861 = vunpack.c.h.b16 %v1766
    %v1862 = vunpack.c.l.b16 %v1767
    %v1863 = vunpack.c.h.b16 %v1767
    %v1864 = vpack.c.b16 %v1804, %v1800
    %v1865 = vpack.c.b16 %v1805, %v1801
    %v1866 = vpack.c.b16 %v1806, %v1802
    %v1867 = vpack.c.b16 %v1807, %v1803
    %v1868 = vpack.c.b16 %v1812, %v1808
    %v1869 = vpack.c.b16 %v1813, %v1809
    %v1870 = vpack.c.b16 %v1814, %v1810
    %v1871 = vpack.c.b16 %v1815, %v1811
    %v1872 = vpack.c.b16 %v1820, %v1816
    %v1873 = vpack.c.b16 %v1821, %v1817
    %v1874 = vpack.c.b16 %v1822, %v1818
    %v1875 = vpack.c.b16 %v1823, %v1819
    %v1876 = vpack.c.b16 %v1828, %v1824
    %v1877 = vpack.c.b16 %v1829, %v1825
    %v1878 = vpack.c.b16 %v1830, %v1826
    %v1879 = vpack.c.b16 %v1831, %v1827
    %v1880 = vpack.c.b16 %v1836, %v1832
    %v1881 = vpack.c.b16 %v1837, %v1833
    %v1882 = vpack.c.b16 %v1838, %v1834
    %v1883 = vpack.c.b16 %v1839, %v1835
    %v1884 = vpack.c.b16 %v1844, %v1840
    %v1885 = vpack.c.b16 %v1845, %v1841
    %v1886 = vpack.c.b16 %v1846, %v1842
    %v1887 = vpack.c.b16 %v1847, %v1843
    %v1888 = vpack.c.b16 %v1852, %v1848
    %v1889 = vpack.c.b16 %v1853, %v1849
    %v1890 = vpack.c.b16 %v1854, %v1850
    %v1891 = vpack.c.b16 %v1855, %v1851
    %v1892 = vpack.c.b16 %v1860, %v1856
    %v1893 = vpack.c.b16 %v1861, %v1857
    %v1894 = vpack.c.b16 %v1862, %v1858
    %v1895 = vpack.c.b16 %v1863, %v1859
    %1928 = vmatpush.bf16.msra.mxu0 %v1892
    %1929 = vmatpush.bf16.msra.mxu0 %v1888
    %1930 = vmatpush.bf16.msra.mxu0 %v1884
    %1931 = vmatpush.bf16.msra.mxu0 %v1880
    %1932 = vmatpush.bf16.msra.mxu0 %v1876
    %1933 = vmatpush.bf16.msra.mxu0 %v1872
    %1934 = vmatpush.bf16.msra.mxu0 %v1868
    %1935 = vmatpush.bf16.msra.mxu0 %v1864
    %1936 = vmatmul.bf16.gmra.mxu0 %v1724
    %v1937 = vpop.f32.mrf.mxu0
    %v1938 = vadd.f32 0.0, %v1937
    %v1939 = vpop.f32.mrf.mxu0
    %1940 = vdwg.mxu0
    %1941 = vmatpush.bf16.msra.mxu0 %v1893
    %1942 = vmatpush.bf16.msra.mxu0 %v1889
    %1943 = vmatpush.bf16.msra.mxu0 %v1885
    %1944 = vmatpush.bf16.msra.mxu0 %v1881
    %1945 = vmatpush.bf16.msra.mxu0 %v1877
    %1946 = vmatpush.bf16.msra.mxu0 %v1873
    %1947 = vmatpush.bf16.msra.mxu0 %v1869
    %1948 = vmatpush.bf16.msra.mxu0 %v1865
    %1949 = vmatmul.bf16.gmra.mxu0 %v1724
    %v1950 = vpop.f32.mrf.mxu0
    %v1951 = vadd.f32 0.0, %v1950
    %v1952 = vpop.f32.mrf.mxu0
    %1953 = vdwg.mxu0
    %1954 = vmatpush.bf16.msra.mxu0 %v1894
    %1955 = vmatpush.bf16.msra.mxu0 %v1890
    %1956 = vmatpush.bf16.msra.mxu0 %v1886
    %1957 = vmatpush.bf16.msra.mxu0 %v1882
    %1958 = vmatpush.bf16.msra.mxu0 %v1878
    %1959 = vmatpush.bf16.msra.mxu0 %v1874
    %1960 = vmatpush.bf16.msra.mxu0 %v1870
    %1961 = vmatpush.bf16.msra.mxu0 %v1866
    %1962 = vmatmul.bf16.gmra.mxu0 %v1724
    %v1963 = vpop.f32.mrf.mxu0
    %v1964 = vadd.f32 0.0, %v1963
    %v1965 = vpop.f32.mrf.mxu0
    %1966 = vdwg.mxu0
    %1967 = vmatpush.bf16.msra.mxu0 %v1895
    %1968 = vmatpush.bf16.msra.mxu0 %v1891
    %1969 = vmatpush.bf16.msra.mxu0 %v1887
    %1970 = vmatpush.bf16.msra.mxu0 %v1883
    %1971 = vmatpush.bf16.msra.mxu0 %v1879
    %1972 = vmatpush.bf16.msra.mxu0 %v1875
    %1973 = vmatpush.bf16.msra.mxu0 %v1871
    %1974 = vmatpush.bf16.msra.mxu0 %v1867
    %1975 = vmatmul.bf16.gmra.mxu0 %v1724
    %v1976 = vpop.f32.mrf.mxu0
    %v1977 = vadd.f32 0.0, %v1976
    %v1978 = vpop.f32.mrf.mxu0
    %1979 = vdwg.mxu0
    %v1980 = vadd.f32 %v1732, %v1938
    %v1981 = vadd.f32 %v1733, %v1951
    %v1982 = vadd.f32 %v1734, %v1964
    %v1983 = vadd.f32 %v1735, %v1977
    %v1984 = vxor.u32 %v1980, 2147483648
    %v1985 = vxor.u32 %v1981, 2147483648
    %v1986 = vxor.u32 %v1982, 2147483648
    %v1987 = vmul.f32 %v1984, 1.442695
    %v1988 = vpow.pop %v1987
    %v1989 = vmul.f32 %v1985, 1.442695
    %v1990 = vpow.pop %v1989
    %v1991 = vmul.f32 %v1986, 1.442695
    %v1992 = vpow.pop %v1991
    %v1993 = vadd.f32 %v1988, 1.0
    %v1994 = vadd.f32 %v1990, 1.0
    %v1995 = vadd.f32 %v1992, 1.0
    %v1996 = vrcp.pop %v1993
    %v1997 = vmul.f32 %v1993, %v1996
    %v1998 = vsub.f32 1.0, %v1997
    %v1999 = vmul.f32 %v1996, %v1998
    %v2000 = vadd.f32 %v1996, %v1999
    %vm2001 = vweird.f32 %v1993
    %vm2002 = vweird.f32 %v1996
    %vm2003 = vmor %vm2001, %vm2002
    %v2004 = vsel %vm2003, %v1996, %v2000
    %v2005 = vand.u32 2147483647, %v1993
    %vm2006 = vcmp.eq.f32.partialorder %v2005, 8.507059e+37
    %v2007 = vand.u32 %v1993, 2147483648
    %v2008 = vor.u32 1.1754944e-38, %v2007
    %v2009 = vsel %vm2006, %v2008, %v2004
    %v2010 = vmul.f32 1.0, %v2009
    %v2011 = vrcp.pop %v1994
    %v2012 = vmul.f32 %v1994, %v2011
    %v2013 = vsub.f32 1.0, %v2012
    %v2014 = vmul.f32 %v2011, %v2013
    %v2015 = vadd.f32 %v2011, %v2014
    %vm2016 = vweird.f32 %v1994
    %vm2017 = vweird.f32 %v2011
    %vm2018 = vmor %vm2016, %vm2017
    %v2019 = vsel %vm2018, %v2011, %v2015
    %v2020 = vand.u32 2147483647, %v1994
    %vm2021 = vcmp.eq.f32.partialorder %v2020, 8.507059e+37
    %v2022 = vand.u32 %v1994, 2147483648
    %v2023 = vor.u32 1.1754944e-38, %v2022
    %v2024 = vsel %vm2021, %v2023, %v2019
    %v2025 = vmul.f32 1.0, %v2024
    %v2026 = vrcp.pop %v1995
    %v2027 = vmul.f32 %v1995, %v2026
    %v2028 = vsub.f32 1.0, %v2027
    %v2029 = vmul.f32 %v2026, %v2028
    %v2030 = vadd.f32 %v2026, %v2029
    %vm2031 = vweird.f32 %v1995
    %vm2032 = vweird.f32 %v2026
    %vm2033 = vmor %vm2031, %vm2032
    %v2034 = vsel %vm2033, %v2026, %v2030
    %v2035 = vand.u32 2147483647, %v1995
    %vm2036 = vcmp.eq.f32.partialorder %v2035, 8.507059e+37
    %v2037 = vand.u32 %v1995, 2147483648
    %v2038 = vor.u32 1.1754944e-38, %v2037
    %v2039 = vsel %vm2036, %v2038, %v2034
    %v2040 = vmul.f32 1.0, %v2039
    %v2041 = vtanh.pop %v1983
    %v2042 = vmul.f32 %v2025, %v1721
    %v2043 = vmul.f32 %v2010, %v2041
    %v2044 = vadd.f32 %v2042, %v2043
    %v2045 = vtanh.pop %v2044
    %v2046 = vmul.f32 %v2040, %v2045
    %v2047 = vpack.c.bf16 %v2046, %v2046
    %s2048 = scalar_lea.vmem [#allocation2], 20
    %2049 = vst [vmem:[%s2048] sm:$0xf] %v2047
    %s2050 = smul.u32 6, 4
    %s2051 = smul.addr %s2050, 4
    %s2052 = scalar_lea.vmem [#allocation3], %s2051
    %v2053 = vld [vmem:[%s2052] sm:$0xff]
    %v2054 = vld [vmem:[%s2052 + $0x8] sm:$0xff]
    %v2055 = vunpack.c.l.bf16 %v2053
    %v2056 = vunpack.c.h.bf16 %v2053
    %v2057 = vunpack.c.l.bf16 %v2054
    %v2058 = vunpack.c.h.bf16 %v2054
    %v2059 = vld [vmem:[#allocation9] sm:$0xff]
    %v2060 = vld [vmem:[#allocation9 + $0x8] sm:$0xff]
    %v2061 = vld [vmem:[#allocation9 + $0x10] sm:$0xff]
    %v2062 = vld [vmem:[#allocation9 + $0x18] sm:$0xff]
    %v2063 = vld [vmem:[#allocation9 + $0x20] sm:$0xff]
    %v2064 = vld [vmem:[#allocation9 + $0x28] sm:$0xff]
    %v2065 = vld [vmem:[#allocation9 + $0x30] sm:$0xff]
    %v2066 = vld [vmem:[#allocation9 + $0x38] sm:$0xff]
    %v2067 = vld [vmem:[#allocation9 + $0x40] sm:$0xff]
    %v2068 = vld [vmem:[#allocation9 + $0x48] sm:$0xff]
    %v2069 = vld [vmem:[#allocation9 + $0x50] sm:$0xff]
    %v2070 = vld [vmem:[#allocation9 + $0x58] sm:$0xff]
    %v2071 = vld [vmem:[#allocation9 + $0x60] sm:$0xff]
    %v2072 = vld [vmem:[#allocation9 + $0x68] sm:$0xff]
    %v2073 = vld [vmem:[#allocation9 + $0x70] sm:$0xff]
    %v2074 = vld [vmem:[#allocation9 + $0x78] sm:$0xff]
    %v2075 = vld [vmem:[#allocation9 + $0x80] sm:$0xff]
    %v2076 = vld [vmem:[#allocation9 + $0x88] sm:$0xff]
    %v2077 = vld [vmem:[#allocation9 + $0x90] sm:$0xff]
    %v2078 = vld [vmem:[#allocation9 + $0x98] sm:$0xff]
    %v2079 = vld [vmem:[#allocation9 + $0xa0] sm:$0xff]
    %v2080 = vld [vmem:[#allocation9 + $0xa8] sm:$0xff]
    %v2081 = vld [vmem:[#allocation9 + $0xb0] sm:$0xff]
    %v2082 = vld [vmem:[#allocation9 + $0xb8] sm:$0xff]
    %v2083 = vld [vmem:[#allocation9 + $0xc0] sm:$0xff]
    %v2084 = vld [vmem:[#allocation9 + $0xc8] sm:$0xff]
    %v2085 = vld [vmem:[#allocation9 + $0xd0] sm:$0xff]
    %v2086 = vld [vmem:[#allocation9 + $0xd8] sm:$0xff]
    %v2087 = vld [vmem:[#allocation9 + $0xe0] sm:$0xff]
    %v2088 = vld [vmem:[#allocation9 + $0xe8] sm:$0xff]
    %v2089 = vld [vmem:[#allocation9 + $0xf0] sm:$0xff]
    %v2090 = vld [vmem:[#allocation9 + $0xf8] sm:$0xff]
    %v2123 = vunpack.c.l.b16 %v2059
    %v2124 = vunpack.c.h.b16 %v2059
    %v2125 = vunpack.c.l.b16 %v2060
    %v2126 = vunpack.c.h.b16 %v2060
    %v2127 = vunpack.c.l.b16 %v2061
    %v2128 = vunpack.c.h.b16 %v2061
    %v2129 = vunpack.c.l.b16 %v2062
    %v2130 = vunpack.c.h.b16 %v2062
    %v2131 = vunpack.c.l.b16 %v2063
    %v2132 = vunpack.c.h.b16 %v2063
    %v2133 = vunpack.c.l.b16 %v2064
    %v2134 = vunpack.c.h.b16 %v2064
    %v2135 = vunpack.c.l.b16 %v2065
    %v2136 = vunpack.c.h.b16 %v2065
    %v2137 = vunpack.c.l.b16 %v2066
    %v2138 = vunpack.c.h.b16 %v2066
    %v2139 = vunpack.c.l.b16 %v2067
    %v2140 = vunpack.c.h.b16 %v2067
    %v2141 = vunpack.c.l.b16 %v2068
    %v2142 = vunpack.c.h.b16 %v2068
    %v2143 = vunpack.c.l.b16 %v2069
    %v2144 = vunpack.c.h.b16 %v2069
    %v2145 = vunpack.c.l.b16 %v2070
    %v2146 = vunpack.c.h.b16 %v2070
    %v2147 = vunpack.c.l.b16 %v2071
    %v2148 = vunpack.c.h.b16 %v2071
    %v2149 = vunpack.c.l.b16 %v2072
    %v2150 = vunpack.c.h.b16 %v2072
    %v2151 = vunpack.c.l.b16 %v2073
    %v2152 = vunpack.c.h.b16 %v2073
    %v2153 = vunpack.c.l.b16 %v2074
    %v2154 = vunpack.c.h.b16 %v2074
    %v2155 = vunpack.c.l.b16 %v2075
    %v2156 = vunpack.c.h.b16 %v2075
    %v2157 = vunpack.c.l.b16 %v2076
    %v2158 = vunpack.c.h.b16 %v2076
    %v2159 = vunpack.c.l.b16 %v2077
    %v2160 = vunpack.c.h.b16 %v2077
    %v2161 = vunpack.c.l.b16 %v2078
    %v2162 = vunpack.c.h.b16 %v2078
    %v2163 = vunpack.c.l.b16 %v2079
    %v2164 = vunpack.c.h.b16 %v2079
    %v2165 = vunpack.c.l.b16 %v2080
    %v2166 = vunpack.c.h.b16 %v2080
    %v2167 = vunpack.c.l.b16 %v2081
    %v2168 = vunpack.c.h.b16 %v2081
    %v2169 = vunpack.c.l.b16 %v2082
    %v2170 = vunpack.c.h.b16 %v2082
    %v2171 = vunpack.c.l.b16 %v2083
    %v2172 = vunpack.c.h.b16 %v2083
    %v2173 = vunpack.c.l.b16 %v2084
    %v2174 = vunpack.c.h.b16 %v2084
    %v2175 = vunpack.c.l.b16 %v2085
    %v2176 = vunpack.c.h.b16 %v2085
    %v2177 = vunpack.c.l.b16 %v2086
    %v2178 = vunpack.c.h.b16 %v2086
    %v2179 = vunpack.c.l.b16 %v2087
    %v2180 = vunpack.c.h.b16 %v2087
    %v2181 = vunpack.c.l.b16 %v2088
    %v2182 = vunpack.c.h.b16 %v2088
    %v2183 = vunpack.c.l.b16 %v2089
    %v2184 = vunpack.c.h.b16 %v2089
    %v2185 = vunpack.c.l.b16 %v2090
    %v2186 = vunpack.c.h.b16 %v2090
    %v2187 = vpack.c.b16 %v2127, %v2123
    %v2188 = vpack.c.b16 %v2128, %v2124
    %v2189 = vpack.c.b16 %v2129, %v2125
    %v2190 = vpack.c.b16 %v2130, %v2126
    %v2191 = vpack.c.b16 %v2135, %v2131
    %v2192 = vpack.c.b16 %v2136, %v2132
    %v2193 = vpack.c.b16 %v2137, %v2133
    %v2194 = vpack.c.b16 %v2138, %v2134
    %v2195 = vpack.c.b16 %v2143, %v2139
    %v2196 = vpack.c.b16 %v2144, %v2140
    %v2197 = vpack.c.b16 %v2145, %v2141
    %v2198 = vpack.c.b16 %v2146, %v2142
    %v2199 = vpack.c.b16 %v2151, %v2147
    %v2200 = vpack.c.b16 %v2152, %v2148
    %v2201 = vpack.c.b16 %v2153, %v2149
    %v2202 = vpack.c.b16 %v2154, %v2150
    %v2203 = vpack.c.b16 %v2159, %v2155
    %v2204 = vpack.c.b16 %v2160, %v2156
    %v2205 = vpack.c.b16 %v2161, %v2157
    %v2206 = vpack.c.b16 %v2162, %v2158
    %v2207 = vpack.c.b16 %v2167, %v2163
    %v2208 = vpack.c.b16 %v2168, %v2164
    %v2209 = vpack.c.b16 %v2169, %v2165
    %v2210 = vpack.c.b16 %v2170, %v2166
    %v2211 = vpack.c.b16 %v2175, %v2171
    %v2212 = vpack.c.b16 %v2176, %v2172
    %v2213 = vpack.c.b16 %v2177, %v2173
    %v2214 = vpack.c.b16 %v2178, %v2174
    %v2215 = vpack.c.b16 %v2183, %v2179
    %v2216 = vpack.c.b16 %v2184, %v2180
    %v2217 = vpack.c.b16 %v2185, %v2181
    %v2218 = vpack.c.b16 %v2186, %v2182
    %2251 = vmatpush.bf16.msra.mxu0 %v2215
    %2252 = vmatpush.bf16.msra.mxu0 %v2211
    %2253 = vmatpush.bf16.msra.mxu0 %v2207
    %2254 = vmatpush.bf16.msra.mxu0 %v2203
    %2255 = vmatpush.bf16.msra.mxu0 %v2199
    %2256 = vmatpush.bf16.msra.mxu0 %v2195
    %2257 = vmatpush.bf16.msra.mxu0 %v2191
    %2258 = vmatpush.bf16.msra.mxu0 %v2187
    %2259 = vmatmul.bf16.gmra.mxu0 %v2047
    %v2260 = vpop.f32.mrf.mxu0
    %v2261 = vadd.f32 0.0, %v2260
    %v2262 = vpop.f32.mrf.mxu0
    %2263 = vdwg.mxu0
    %2264 = vmatpush.bf16.msra.mxu0 %v2216
    %2265 = vmatpush.bf16.msra.mxu0 %v2212
    %2266 = vmatpush.bf16.msra.mxu0 %v2208
    %2267 = vmatpush.bf16.msra.mxu0 %v2204
    %2268 = vmatpush.bf16.msra.mxu0 %v2200
    %2269 = vmatpush.bf16.msra.mxu0 %v2196
    %2270 = vmatpush.bf16.msra.mxu0 %v2192
    %2271 = vmatpush.bf16.msra.mxu0 %v2188
    %2272 = vmatmul.bf16.gmra.mxu0 %v2047
    %v2273 = vpop.f32.mrf.mxu0
    %v2274 = vadd.f32 0.0, %v2273
    %v2275 = vpop.f32.mrf.mxu0
    %2276 = vdwg.mxu0
    %2277 = vmatpush.bf16.msra.mxu0 %v2217
    %2278 = vmatpush.bf16.msra.mxu0 %v2213
    %2279 = vmatpush.bf16.msra.mxu0 %v2209
    %2280 = vmatpush.bf16.msra.mxu0 %v2205
    %2281 = vmatpush.bf16.msra.mxu0 %v2201
    %2282 = vmatpush.bf16.msra.mxu0 %v2197
    %2283 = vmatpush.bf16.msra.mxu0 %v2193
    %2284 = vmatpush.bf16.msra.mxu0 %v2189
    %2285 = vmatmul.bf16.gmra.mxu0 %v2047
    %v2286 = vpop.f32.mrf.mxu0
    %v2287 = vadd.f32 0.0, %v2286
    %v2288 = vpop.f32.mrf.mxu0
    %2289 = vdwg.mxu0
    %2290 = vmatpush.bf16.msra.mxu0 %v2218
    %2291 = vmatpush.bf16.msra.mxu0 %v2214
    %2292 = vmatpush.bf16.msra.mxu0 %v2210
    %2293 = vmatpush.bf16.msra.mxu0 %v2206
    %2294 = vmatpush.bf16.msra.mxu0 %v2202
    %2295 = vmatpush.bf16.msra.mxu0 %v2198
    %2296 = vmatpush.bf16.msra.mxu0 %v2194
    %2297 = vmatpush.bf16.msra.mxu0 %v2190
    %2298 = vmatmul.bf16.gmra.mxu0 %v2047
    %v2299 = vpop.f32.mrf.mxu0
    %v2300 = vadd.f32 0.0, %v2299
    %v2301 = vpop.f32.mrf.mxu0
    %2302 = vdwg.mxu0
    %v2303 = vadd.f32 %v2055, %v2261
    %v2304 = vadd.f32 %v2056, %v2274
    %v2305 = vadd.f32 %v2057, %v2287
    %v2306 = vadd.f32 %v2058, %v2300
    %v2307 = vxor.u32 %v2303, 2147483648
    %v2308 = vxor.u32 %v2304, 2147483648
    %v2309 = vxor.u32 %v2305, 2147483648
    %v2310 = vmul.f32 %v2307, 1.442695
    %v2311 = vpow.pop %v2310
    %v2312 = vmul.f32 %v2308, 1.442695
    %v2313 = vpow.pop %v2312
    %v2314 = vmul.f32 %v2309, 1.442695
    %v2315 = vpow.pop %v2314
    %v2316 = vadd.f32 %v2311, 1.0
    %v2317 = vadd.f32 %v2313, 1.0
    %v2318 = vadd.f32 %v2315, 1.0
    %v2319 = vrcp.pop %v2316
    %v2320 = vmul.f32 %v2316, %v2319
    %v2321 = vsub.f32 1.0, %v2320
    %v2322 = vmul.f32 %v2319, %v2321
    %v2323 = vadd.f32 %v2319, %v2322
    %vm2324 = vweird.f32 %v2316
    %vm2325 = vweird.f32 %v2319
    %vm2326 = vmor %vm2324, %vm2325
    %v2327 = vsel %vm2326, %v2319, %v2323
    %v2328 = vand.u32 2147483647, %v2316
    %vm2329 = vcmp.eq.f32.partialorder %v2328, 8.507059e+37
    %v2330 = vand.u32 %v2316, 2147483648
    %v2331 = vor.u32 1.1754944e-38, %v2330
    %v2332 = vsel %vm2329, %v2331, %v2327
    %v2333 = vmul.f32 1.0, %v2332
    %v2334 = vrcp.pop %v2317
    %v2335 = vmul.f32 %v2317, %v2334
    %v2336 = vsub.f32 1.0, %v2335
    %v2337 = vmul.f32 %v2334, %v2336
    %v2338 = vadd.f32 %v2334, %v2337
    %vm2339 = vweird.f32 %v2317
    %vm2340 = vweird.f32 %v2334
    %vm2341 = vmor %vm2339, %vm2340
    %v2342 = vsel %vm2341, %v2334, %v2338
    %v2343 = vand.u32 2147483647, %v2317
    %vm2344 = vcmp.eq.f32.partialorder %v2343, 8.507059e+37
    %v2345 = vand.u32 %v2317, 2147483648
    %v2346 = vor.u32 1.1754944e-38, %v2345
    %v2347 = vsel %vm2344, %v2346, %v2342
    %v2348 = vmul.f32 1.0, %v2347
    %v2349 = vrcp.pop %v2318
    %v2350 = vmul.f32 %v2318, %v2349
    %v2351 = vsub.f32 1.0, %v2350
    %v2352 = vmul.f32 %v2349, %v2351
    %v2353 = vadd.f32 %v2349, %v2352
    %vm2354 = vweird.f32 %v2318
    %vm2355 = vweird.f32 %v2349
    %vm2356 = vmor %vm2354, %vm2355
    %v2357 = vsel %vm2356, %v2349, %v2353
    %v2358 = vand.u32 2147483647, %v2318
    %vm2359 = vcmp.eq.f32.partialorder %v2358, 8.507059e+37
    %v2360 = vand.u32 %v2318, 2147483648
    %v2361 = vor.u32 1.1754944e-38, %v2360
    %v2362 = vsel %vm2359, %v2361, %v2357
    %v2363 = vmul.f32 1.0, %v2362
    %v2364 = vtanh.pop %v2306
    %v2365 = vmul.f32 %v2348, %v2044
    %v2366 = vmul.f32 %v2333, %v2364
    %v2367 = vadd.f32 %v2365, %v2366
    %v2368 = vtanh.pop %v2367
    %v2369 = vmul.f32 %v2363, %v2368
    %v2370 = vpack.c.bf16 %v2369, %v2369
    %s2371 = scalar_lea.vmem [#allocation2], 24
    %2372 = vst [vmem:[%s2371] sm:$0xf] %v2370
    %s2373 = smul.u32 7, 4
    %s2374 = smul.addr %s2373, 4
    %s2375 = scalar_lea.vmem [#allocation3], %s2374
    %v2376 = vld [vmem:[%s2375] sm:$0xff]
    %v2377 = vld [vmem:[%s2375 + $0x8] sm:$0xff]
    %v2378 = vunpack.c.l.bf16 %v2376
    %v2379 = vunpack.c.h.bf16 %v2376
    %v2380 = vunpack.c.l.bf16 %v2377
    %v2381 = vunpack.c.h.bf16 %v2377
    %v2382 = vld [vmem:[#allocation9] sm:$0xff]
    %v2383 = vld [vmem:[#allocation9 + $0x8] sm:$0xff]
    %v2384 = vld [vmem:[#allocation9 + $0x10] sm:$0xff]
    %v2385 = vld [vmem:[#allocation9 + $0x18] sm:$0xff]
    %v2386 = vld [vmem:[#allocation9 + $0x20] sm:$0xff]
    %v2387 = vld [vmem:[#allocation9 + $0x28] sm:$0xff]
    %v2388 = vld [vmem:[#allocation9 + $0x30] sm:$0xff]
    %v2389 = vld [vmem:[#allocation9 + $0x38] sm:$0xff]
    %v2390 = vld [vmem:[#allocation9 + $0x40] sm:$0xff]
    %v2391 = vld [vmem:[#allocation9 + $0x48] sm:$0xff]
    %v2392 = vld [vmem:[#allocation9 + $0x50] sm:$0xff]
    %v2393 = vld [vmem:[#allocation9 + $0x58] sm:$0xff]
    %v2394 = vld [vmem:[#allocation9 + $0x60] sm:$0xff]
    %v2395 = vld [vmem:[#allocation9 + $0x68] sm:$0xff]
    %v2396 = vld [vmem:[#allocation9 + $0x70] sm:$0xff]
    %v2397 = vld [vmem:[#allocation9 + $0x78] sm:$0xff]
    %v2398 = vld [vmem:[#allocation9 + $0x80] sm:$0xff]
    %v2399 = vld [vmem:[#allocation9 + $0x88] sm:$0xff]
    %v2400 = vld [vmem:[#allocation9 + $0x90] sm:$0xff]
    %v2401 = vld [vmem:[#allocation9 + $0x98] sm:$0xff]
    %v2402 = vld [vmem:[#allocation9 + $0xa0] sm:$0xff]
    %v2403 = vld [vmem:[#allocation9 + $0xa8] sm:$0xff]
    %v2404 = vld [vmem:[#allocation9 + $0xb0] sm:$0xff]
    %v2405 = vld [vmem:[#allocation9 + $0xb8] sm:$0xff]
    %v2406 = vld [vmem:[#allocation9 + $0xc0] sm:$0xff]
    %v2407 = vld [vmem:[#allocation9 + $0xc8] sm:$0xff]
    %v2408 = vld [vmem:[#allocation9 + $0xd0] sm:$0xff]
    %v2409 = vld [vmem:[#allocation9 + $0xd8] sm:$0xff]
    %v2410 = vld [vmem:[#allocation9 + $0xe0] sm:$0xff]
    %v2411 = vld [vmem:[#allocation9 + $0xe8] sm:$0xff]
    %v2412 = vld [vmem:[#allocation9 + $0xf0] sm:$0xff]
    %v2413 = vld [vmem:[#allocation9 + $0xf8] sm:$0xff]
    %v2446 = vunpack.c.l.b16 %v2382
    %v2447 = vunpack.c.h.b16 %v2382
    %v2448 = vunpack.c.l.b16 %v2383
    %v2449 = vunpack.c.h.b16 %v2383
    %v2450 = vunpack.c.l.b16 %v2384
    %v2451 = vunpack.c.h.b16 %v2384
    %v2452 = vunpack.c.l.b16 %v2385
    %v2453 = vunpack.c.h.b16 %v2385
    %v2454 = vunpack.c.l.b16 %v2386
    %v2455 = vunpack.c.h.b16 %v2386
    %v2456 = vunpack.c.l.b16 %v2387
    %v2457 = vunpack.c.h.b16 %v2387
    %v2458 = vunpack.c.l.b16 %v2388
    %v2459 = vunpack.c.h.b16 %v2388
    %v2460 = vunpack.c.l.b16 %v2389
    %v2461 = vunpack.c.h.b16 %v2389
    %v2462 = vunpack.c.l.b16 %v2390
    %v2463 = vunpack.c.h.b16 %v2390
    %v2464 = vunpack.c.l.b16 %v2391
    %v2465 = vunpack.c.h.b16 %v2391
    %v2466 = vunpack.c.l.b16 %v2392
    %v2467 = vunpack.c.h.b16 %v2392
    %v2468 = vunpack.c.l.b16 %v2393
    %v2469 = vunpack.c.h.b16 %v2393
    %v2470 = vunpack.c.l.b16 %v2394
    %v2471 = vunpack.c.h.b16 %v2394
    %v2472 = vunpack.c.l.b16 %v2395
    %v2473 = vunpack.c.h.b16 %v2395
    %v2474 = vunpack.c.l.b16 %v2396
    %v2475 = vunpack.c.h.b16 %v2396
    %v2476 = vunpack.c.l.b16 %v2397
    %v2477 = vunpack.c.h.b16 %v2397
    %v2478 = vunpack.c.l.b16 %v2398
    %v2479 = vunpack.c.h.b16 %v2398
    %v2480 = vunpack.c.l.b16 %v2399
    %v2481 = vunpack.c.h.b16 %v2399
    %v2482 = vunpack.c.l.b16 %v2400
    %v2483 = vunpack.c.h.b16 %v2400
    %v2484 = vunpack.c.l.b16 %v2401
    %v2485 = vunpack.c.h.b16 %v2401
    %v2486 = vunpack.c.l.b16 %v2402
    %v2487 = vunpack.c.h.b16 %v2402
    %v2488 = vunpack.c.l.b16 %v2403
    %v2489 = vunpack.c.h.b16 %v2403
    %v2490 = vunpack.c.l.b16 %v2404
    %v2491 = vunpack.c.h.b16 %v2404
    %v2492 = vunpack.c.l.b16 %v2405
    %v2493 = vunpack.c.h.b16 %v2405
    %v2494 = vunpack.c.l.b16 %v2406
    %v2495 = vunpack.c.h.b16 %v2406
    %v2496 = vunpack.c.l.b16 %v2407
    %v2497 = vunpack.c.h.b16 %v2407
    %v2498 = vunpack.c.l.b16 %v2408
    %v2499 = vunpack.c.h.b16 %v2408
    %v2500 = vunpack.c.l.b16 %v2409
    %v2501 = vunpack.c.h.b16 %v2409
    %v2502 = vunpack.c.l.b16 %v2410
    %v2503 = vunpack.c.h.b16 %v2410
    %v2504 = vunpack.c.l.b16 %v2411
    %v2505 = vunpack.c.h.b16 %v2411
    %v2506 = vunpack.c.l.b16 %v2412
    %v2507 = vunpack.c.h.b16 %v2412
    %v2508 = vunpack.c.l.b16 %v2413
    %v2509 = vunpack.c.h.b16 %v2413
    %v2510 = vpack.c.b16 %v2450, %v2446
    %v2511 = vpack.c.b16 %v2451, %v2447
    %v2512 = vpack.c.b16 %v2452, %v2448
    %v2513 = vpack.c.b16 %v2453, %v2449
    %v2514 = vpack.c.b16 %v2458, %v2454
    %v2515 = vpack.c.b16 %v2459, %v2455
    %v2516 = vpack.c.b16 %v2460, %v2456
    %v2517 = vpack.c.b16 %v2461, %v2457
    %v2518 = vpack.c.b16 %v2466, %v2462
    %v2519 = vpack.c.b16 %v2467, %v2463
    %v2520 = vpack.c.b16 %v2468, %v2464
    %v2521 = vpack.c.b16 %v2469, %v2465
    %v2522 = vpack.c.b16 %v2474, %v2470
    %v2523 = vpack.c.b16 %v2475, %v2471
    %v2524 = vpack.c.b16 %v2476, %v2472
    %v2525 = vpack.c.b16 %v2477, %v2473
    %v2526 = vpack.c.b16 %v2482, %v2478
    %v2527 = vpack.c.b16 %v2483, %v2479
    %v2528 = vpack.c.b16 %v2484, %v2480
    %v2529 = vpack.c.b16 %v2485, %v2481
    %v2530 = vpack.c.b16 %v2490, %v2486
    %v2531 = vpack.c.b16 %v2491, %v2487
    %v2532 = vpack.c.b16 %v2492, %v2488
    %v2533 = vpack.c.b16 %v2493, %v2489
    %v2534 = vpack.c.b16 %v2498, %v2494
    %v2535 = vpack.c.b16 %v2499, %v2495
    %v2536 = vpack.c.b16 %v2500, %v2496
    %v2537 = vpack.c.b16 %v2501, %v2497
    %v2538 = vpack.c.b16 %v2506, %v2502
    %v2539 = vpack.c.b16 %v2507, %v2503
    %v2540 = vpack.c.b16 %v2508, %v2504
    %v2541 = vpack.c.b16 %v2509, %v2505
    %2574 = vmatpush.bf16.msra.mxu0 %v2538
    %2575 = vmatpush.bf16.msra.mxu0 %v2534
    %2576 = vmatpush.bf16.msra.mxu0 %v2530
    %2577 = vmatpush.bf16.msra.mxu0 %v2526
    %2578 = vmatpush.bf16.msra.mxu0 %v2522
    %2579 = vmatpush.bf16.msra.mxu0 %v2518
    %2580 = vmatpush.bf16.msra.mxu0 %v2514
    %2581 = vmatpush.bf16.msra.mxu0 %v2510
    %2582 = vmatmul.bf16.gmra.mxu0 %v2370
    %v2583 = vpop.f32.mrf.mxu0
    %v2584 = vadd.f32 0.0, %v2583
    %v2585 = vpop.f32.mrf.mxu0
    %2586 = vdwg.mxu0
    %2587 = vmatpush.bf16.msra.mxu0 %v2539
    %2588 = vmatpush.bf16.msra.mxu0 %v2535
    %2589 = vmatpush.bf16.msra.mxu0 %v2531
    %2590 = vmatpush.bf16.msra.mxu0 %v2527
    %2591 = vmatpush.bf16.msra.mxu0 %v2523
    %2592 = vmatpush.bf16.msra.mxu0 %v2519
    %2593 = vmatpush.bf16.msra.mxu0 %v2515
    %2594 = vmatpush.bf16.msra.mxu0 %v2511
    %2595 = vmatmul.bf16.gmra.mxu0 %v2370
    %v2596 = vpop.f32.mrf.mxu0
    %v2597 = vadd.f32 0.0, %v2596
    %v2598 = vpop.f32.mrf.mxu0
    %2599 = vdwg.mxu0
    %2600 = vmatpush.bf16.msra.mxu0 %v2540
    %2601 = vmatpush.bf16.msra.mxu0 %v2536
    %2602 = vmatpush.bf16.msra.mxu0 %v2532
    %2603 = vmatpush.bf16.msra.mxu0 %v2528
    %2604 = vmatpush.bf16.msra.mxu0 %v2524
    %2605 = vmatpush.bf16.msra.mxu0 %v2520
    %2606 = vmatpush.bf16.msra.mxu0 %v2516
    %2607 = vmatpush.bf16.msra.mxu0 %v2512
    %2608 = vmatmul.bf16.gmra.mxu0 %v2370
    %v2609 = vpop.f32.mrf.mxu0
    %v2610 = vadd.f32 0.0, %v2609
    %v2611 = vpop.f32.mrf.mxu0
    %2612 = vdwg.mxu0
    %2613 = vmatpush.bf16.msra.mxu0 %v2541
    %2614 = vmatpush.bf16.msra.mxu0 %v2537
    %2615 = vmatpush.bf16.msra.mxu0 %v2533
    %2616 = vmatpush.bf16.msra.mxu0 %v2529
    %2617 = vmatpush.bf16.msra.mxu0 %v2525
    %2618 = vmatpush.bf16.msra.mxu0 %v2521
    %2619 = vmatpush.bf16.msra.mxu0 %v2517
    %2620 = vmatpush.bf16.msra.mxu0 %v2513
    %2621 = vmatmul.bf16.gmra.mxu0 %v2370
    %v2622 = vpop.f32.mrf.mxu0
    %v2623 = vadd.f32 0.0, %v2622
    %v2624 = vpop.f32.mrf.mxu0
    %2625 = vdwg.mxu0
    %v2626 = vadd.f32 %v2378, %v2584
    %v2627 = vadd.f32 %v2379, %v2597
    %v2628 = vadd.f32 %v2380, %v2610
    %v2629 = vadd.f32 %v2381, %v2623
    %v2630 = vxor.u32 %v2626, 2147483648
    %v2631 = vxor.u32 %v2627, 2147483648
    %v2632 = vxor.u32 %v2628, 2147483648
    %v2633 = vmul.f32 %v2630, 1.442695
    %v2634 = vpow.pop %v2633
    %v2635 = vmul.f32 %v2631, 1.442695
    %v2636 = vpow.pop %v2635
    %v2637 = vmul.f32 %v2632, 1.442695
    %v2638 = vpow.pop %v2637
    %v2639 = vadd.f32 %v2634, 1.0
    %v2640 = vadd.f32 %v2636, 1.0
    %v2641 = vadd.f32 %v2638, 1.0
    %v2642 = vrcp.pop %v2639
    %v2643 = vmul.f32 %v2639, %v2642
    %v2644 = vsub.f32 1.0, %v2643
    %v2645 = vmul.f32 %v2642, %v2644
    %v2646 = vadd.f32 %v2642, %v2645
    %vm2647 = vweird.f32 %v2639
    %vm2648 = vweird.f32 %v2642
    %vm2649 = vmor %vm2647, %vm2648
    %v2650 = vsel %vm2649, %v2642, %v2646
    %v2651 = vand.u32 2147483647, %v2639
    %vm2652 = vcmp.eq.f32.partialorder %v2651, 8.507059e+37
    %v2653 = vand.u32 %v2639, 2147483648
    %v2654 = vor.u32 1.1754944e-38, %v2653
    %v2655 = vsel %vm2652, %v2654, %v2650
    %v2656 = vmul.f32 1.0, %v2655
    %v2657 = vrcp.pop %v2640
    %v2658 = vmul.f32 %v2640, %v2657
    %v2659 = vsub.f32 1.0, %v2658
    %v2660 = vmul.f32 %v2657, %v2659
    %v2661 = vadd.f32 %v2657, %v2660
    %vm2662 = vweird.f32 %v2640
    %vm2663 = vweird.f32 %v2657
    %vm2664 = vmor %vm2662, %vm2663
    %v2665 = vsel %vm2664, %v2657, %v2661
    %v2666 = vand.u32 2147483647, %v2640
    %vm2667 = vcmp.eq.f32.partialorder %v2666, 8.507059e+37
    %v2668 = vand.u32 %v2640, 2147483648
    %v2669 = vor.u32 1.1754944e-38, %v2668
    %v2670 = vsel %vm2667, %v2669, %v2665
    %v2671 = vmul.f32 1.0, %v2670
    %v2672 = vrcp.pop %v2641
    %v2673 = vmul.f32 %v2641, %v2672
    %v2674 = vsub.f32 1.0, %v2673
    %v2675 = vmul.f32 %v2672, %v2674
    %v2676 = vadd.f32 %v2672, %v2675
    %vm2677 = vweird.f32 %v2641
    %vm2678 = vweird.f32 %v2672
    %vm2679 = vmor %vm2677, %vm2678
    %v2680 = vsel %vm2679, %v2672, %v2676
    %v2681 = vand.u32 2147483647, %v2641
    %vm2682 = vcmp.eq.f32.partialorder %v2681, 8.507059e+37
    %v2683 = vand.u32 %v2641, 2147483648
    %v2684 = vor.u32 1.1754944e-38, %v2683
    %v2685 = vsel %vm2682, %v2684, %v2680
    %v2686 = vmul.f32 1.0, %v2685
    %v2687 = vtanh.pop %v2629
    %v2688 = vmul.f32 %v2671, %v2367
    %v2689 = vmul.f32 %v2656, %v2687
    %v2690 = vadd.f32 %v2688, %v2689
    %v2691 = vtanh.pop %v2690
    %v2692 = vmul.f32 %v2686, %v2691
    %v2693 = vpack.c.bf16 %v2692, %v2692
    %s2694 = scalar_lea.vmem [#allocation2], 28
    %2695 = vst [vmem:[%s2694] sm:$0xf] %v2693
    %2696 = vst [vmem:[#allocation13] sm:$0xff] %v2692
    %2697 = vst [vmem:[#allocation15] sm:$0xff] %v2690
    %v2698 = vld [vmem:[#allocation2] sm:$0xf]
    %v2699 = vld [vmem:[#allocation2 + $0x4] sm:$0xf]
    %v2700 = vld [vmem:[#allocation2 + $0x8] sm:$0xf]
    %v2701 = vld [vmem:[#allocation2 + $0xc] sm:$0xf]
    %v2702 = vld [vmem:[#allocation2 + $0x10] sm:$0xf]
    %v2703 = vld [vmem:[#allocation2 + $0x14] sm:$0xf]
    %v2704 = vld [vmem:[#allocation2 + $0x18] sm:$0xf]
    %v2705 = vld [vmem:[#allocation2 + $0x1c] sm:$0xf]
    %v2706 = vld [vmem:[#allocation11] sm:$0xf]
    %v2707 = vld [vmem:[#allocation11 + $0x4] sm:$0xf]
    %v2708 = vld [vmem:[#allocation11 + $0x8] sm:$0xf]
    %v2709 = vld [vmem:[#allocation11 + $0xc] sm:$0xf]
    %v2710 = vld [vmem:[#allocation11 + $0x10] sm:$0xf]
    %v2711 = vld [vmem:[#allocation11 + $0x14] sm:$0xf]
    %v2712 = vld [vmem:[#allocation11 + $0x18] sm:$0xf]
    %v2713 = vld [vmem:[#allocation11 + $0x1c] sm:$0xf]
    %v2714 = vld [vmem:[#allocation11 + $0x20] sm:$0xf]
    %v2715 = vld [vmem:[#allocation11 + $0x24] sm:$0xf]
    %v2716 = vld [vmem:[#allocation11 + $0x28] sm:$0xf]
    %v2717 = vld [vmem:[#allocation11 + $0x2c] sm:$0xf]
    %v2718 = vld [vmem:[#allocation11 + $0x30] sm:$0xf]
    %v2719 = vld [vmem:[#allocation11 + $0x34] sm:$0xf]
    %v2720 = vld [vmem:[#allocation11 + $0x38] sm:$0xf]
    %v2721 = vld [vmem:[#allocation11 + $0x3c] sm:$0xf]
    %v2722 = vld [vmem:[%s5] sm:$0x1]
    %v2724 = vperm.slane %v2722, 0
    %v2734 = vunpack.c.l.b16 %v2698
    %v2735 = vunpack.c.l.b16 %v2699
    %v2736 = vunpack.c.l.b16 %v2700
    %v2737 = vunpack.c.l.b16 %v2701
    %v2738 = vunpack.c.l.b16 %v2702
    %v2739 = vunpack.c.l.b16 %v2703
    %v2740 = vunpack.c.l.b16 %v2704
    %v2741 = vunpack.c.l.b16 %v2705
    %v2742 = vpack.c.b16 %v2735, %v2734
    %v2743 = vpack.c.b16 %v2737, %v2736
    %v2744 = vpack.c.b16 %v2739, %v2738
    %v2745 = vpack.c.b16 %v2741, %v2740
    %v2766 = vunpack.c.l.b16 %v2706
    %v2767 = vunpack.c.l.b16 %v2707
    %v2768 = vunpack.c.l.b16 %v2708
    %v2769 = vunpack.c.l.b16 %v2709
    %v2770 = vunpack.c.l.b16 %v2710
    %v2771 = vunpack.c.l.b16 %v2711
    %v2772 = vunpack.c.l.b16 %v2712
    %v2773 = vunpack.c.l.b16 %v2713
    %v2774 = vunpack.c.l.b16 %v2714
    %v2775 = vunpack.c.l.b16 %v2715
    %v2776 = vunpack.c.l.b16 %v2716
    %v2777 = vunpack.c.l.b16 %v2717
    %v2778 = vunpack.c.l.b16 %v2718
    %v2779 = vunpack.c.l.b16 %v2719
    %v2780 = vunpack.c.l.b16 %v2720
    %v2781 = vunpack.c.l.b16 %v2721
    %v2782 = vpack.c.b16 %v2767, %v2766
    %v2783 = vpack.c.b16 %v2769, %v2768
    %v2784 = vpack.c.b16 %v2771, %v2770
    %v2785 = vpack.c.b16 %v2773, %v2772
    %v2786 = vpack.c.b16 %v2775, %v2774
    %v2787 = vpack.c.b16 %v2777, %v2776
    %v2788 = vpack.c.b16 %v2779, %v2778
    %v2789 = vpack.c.b16 %v2781, %v2780
    %2798 = vmatpush.bf16.msra.mxu0 %v2789
    %2799 = vmatpush.bf16.msra.mxu0 %v2788
    %2800 = vmatpush.bf16.msra.mxu0 %v2787
    %2801 = vmatpush.bf16.msra.mxu0 %v2786
    %2802 = vmatpush.bf16.msra.mxu0 %v2785
    %2803 = vmatpush.bf16.msra.mxu0 %v2784
    %2804 = vmatpush.bf16.msra.mxu0 %v2783
    %2805 = vmatpush.bf16.msra.mxu0 %v2782
    %2806 = vmatmul.bf16.gmra.mxu0 %v2742
    %v2807 = vpop.f32.mrf.mxu0
    %v2808 = vadd.f32 %v2724, %v2807
    %v2809 = vpop.f32.mrf.mxu0
    %v2810 = vadd.f32 %v2724, %v2809
    %2811 = vmatmul.bf16.gmra.mxu0 %v2743
    %v2812 = vpop.f32.mrf.mxu0
    %v2813 = vadd.f32 %v2724, %v2812
    %v2814 = vpop.f32.mrf.mxu0
    %v2815 = vadd.f32 %v2724, %v2814
    %2816 = vmatmul.bf16.gmra.mxu0 %v2744
    %v2817 = vpop.f32.mrf.mxu0
    %v2818 = vadd.f32 %v2724, %v2817
    %v2819 = vpop.f32.mrf.mxu0
    %v2820 = vadd.f32 %v2724, %v2819
    %2821 = vmatmul.bf16.gmra.mxu0 %v2745
    %v2822 = vpop.f32.mrf.mxu0
    %v2823 = vadd.f32 %v2724, %v2822
    %v2824 = vpop.f32.mrf.mxu0
    %v2825 = vadd.f32 %v2724, %v2824
    %2826 = vdwg.mxu0
    %2827 = vst [vmem:[#allocation12] sm:$0xff] %v2808
    %2828 = vst [vmem:[#allocation12 + $0x8] sm:$0xff] %v2810
    %2829 = vst [vmem:[#allocation12 + $0x10] sm:$0xff] %v2813
    %2830 = vst [vmem:[#allocation12 + $0x18] sm:$0xff] %v2815
    %2831 = vst [vmem:[#allocation12 + $0x20] sm:$0xff] %v2818
    %2832 = vst [vmem:[#allocation12 + $0x28] sm:$0xff] %v2820
    %2833 = vst [vmem:[#allocation12 + $0x30] sm:$0xff] %v2823
    %2834 = vst [vmem:[#allocation12 + $0x38] sm:$0xff] %v2825
    // Predicated region
    $region50: #{tpu_custom_call.1} parent=1 // pred_check
      _
    $region51: #{tpu_custom_call.1} parent=1 // pred_check_branch
      %2836 = sbr.rel (0) target = $region53
    $region52: #{tpu_custom_call.1} parent=1 // pred_region
      %2838 = vsyncadd [#allocation5], 0
      %s2839 = sshll.u32 [#allocation12], 4
      %s2840 = int_to_ptr.vmem [resolvable:$true] %s2839
      %s2841 = sshll.u32 %s6, 4
      %s2842 = int_to_ptr.hbm [resolvable:$true] %s2841
      %2847 = dma.vmem_to_hbm [thread:$0]  %s2840, 1024, %s2842, [#allocation5], 128, 128, 8
    $region53: #{tpu_custom_call.1} parent=1 // pred_fallthru
      _
    // Predicated region
    $region54: #{tpu_custom_call.1} parent=1 // pred_check
      _
    $region55: #{tpu_custom_call.1} parent=1 // pred_check_branch
      %2849 = sbr.rel (0) target = $region57
    $region56: #{tpu_custom_call.1} parent=1 // pred_region
      %2851 = vsyncadd [#allocation14], 0
      %s2853 = sshll.u32 [#allocation13], 4
      %s2854 = int_to_ptr.vmem [resolvable:$true] %s2853
      %s2855 = sshll.u32 %s7, 4
      %s2856 = int_to_ptr.hbm [resolvable:$true] %s2855
      %2858 = dma.vmem_to_hbm [thread:$0]  %s2854, 128, %s2856, [#allocation14]
    $region57: #{tpu_custom_call.1} parent=1 // pred_fallthru
      _
    // Predicated region
    $region58: #{tpu_custom_call.1} parent=1 // pred_check
      _
    $region59: #{tpu_custom_call.1} parent=1 // pred_check_branch
      %2860 = sbr.rel (0) target = $region61
    $region60: #{tpu_custom_call.1} parent=1 // pred_region
      %2862 = vsyncadd [#allocation14], 0
      %s2864 = sshll.u32 [#allocation15], 4
      %s2865 = int_to_ptr.vmem [resolvable:$true] %s2864
      %s2866 = sshll.u32 %s8, 4
      %s2867 = int_to_ptr.hbm [resolvable:$true] %s2866
      %2869 = dma.vmem_to_hbm [thread:$0]  %s2865, 128, %s2867, [#allocation14]
    $region61: #{tpu_custom_call.1} parent=1 // pred_fallthru
      _
    // Predicated region
    $region62: #{tpu_custom_call.1} parent=1 // pred_check
      _
    $region63: #{tpu_custom_call.1} parent=1 // pred_check_branch
      %2871 = sbr.rel (0) target = $region65
    $region64: #{tpu_custom_call.1} parent=1 // pred_region
      %2873 = dma.done [#allocation5], 1024
    $region65: #{tpu_custom_call.1} parent=1 // pred_fallthru
      _
    // Predicated region
    $region66: #{tpu_custom_call.1} parent=1 // pred_check
      _
    $region67: #{tpu_custom_call.1} parent=1 // pred_check_branch
      %2875 = sbr.rel (0) target = $region69
    $region68: #{tpu_custom_call.1} parent=1 // pred_region
      %2877 = dma.done [#allocation14], 128
    $region69: #{tpu_custom_call.1} parent=1 // pred_fallthru
      _
    // Predicated region
    $region70: #{tpu_custom_call.1} parent=1 // pred_check
      _
    $region71: #{tpu_custom_call.1} parent=1 // pred_check_branch
      %2879 = sbr.rel (0) target = $region73
    $region72: #{tpu_custom_call.1} parent=1 // pred_region
      %2881 = dma.done [#allocation14], 128
    $region73: #{tpu_custom_call.1} parent=1 // pred_fallthru
      _
    %2882 = vsyncpa [#allocation4], 1
    %2883 = vsyncpa [#allocation7], 1
    %2884 = vsyncpa [#allocation10], 1
    %2885 = vsyncpa [#allocation5], 1
    %2886 = vsyncpa [#allocation14], 1

</llo_original>
